<compile_context>
chip_gen: v7x
topology: tpu7x:2x2x1
jax: 0.10.0
libtpu: 0.0.40
codegen_flags: <defaults>
</compile_context>

<pallas_src>
import jax
import jax.numpy as jnp
from jax.experimental import pallas as pl
from jax.experimental.pallas import tpu as pltpu

BATCH = 2
N_FEAT = 16          # channels
REDUCTION = 4        # squeeze channels = 4
KSIZE = 3
H = W = 16
PAD = KSIZE // 2

HP = H + 2 * PAD                             # padded height (18)
WP = W + 2 * PAD                             # padded width / lane row stride (18)
MAX_OFF = (KSIZE - 1) * WP + (KSIZE - 1)     # largest tap offset (38)
SHIFT = PAD * WP + PAD                       # offset of pixel (0,0) inside the padded image (19)
FRONT = SHIFT                                # zero lanes prepended to the slab (19)


def _round_up(v, m):
    return ((v + m - 1) // m) * m


L_OUT = _round_up(H * WP, 128)                              # 384: conv2 / output slab width
L_PAD = L_OUT + MAX_OFF                                     # 422: conv1-output (= conv2-input) width
L_IN = _round_up(max(MAX_OFF + L_PAD,                       # 460 needed for conv1 taps
                     FRONT + SHIFT + L_OUT), 128)           # 512: input slab width


def rcab_kernel(x_ref, w1_ref, b1_ref, w2_ref, b2_ref,
                wd_ref, bd_ref, wu_ref, bu_ref,
                mpad_ref, mval_ref, out_ref):
    x_slab = x_ref[0]                                        # (C, L_IN)

    # ---- conv1 (3x3, SAME) as ONE im2col MXU dot: (C,9C) @ (9C,L_PAD) ----
    # The slab is front-shifted by FRONT lanes, so lane l of h1 is already the
    # conv2-padded position l (no re-pad lane shift needed afterwards).
    cols1 = jnp.concatenate(
        [x_slab[:, kh * WP + kw: kh * WP + kw + L_PAD]
         for kh in range(KSIZE) for kw in range(KSIZE)], axis=0)
    h1 = jnp.dot(w1_ref[...], cols1, preferred_element_type=jnp.float32)
    h1 = jnp.maximum(h1 + b1_ref[...], 0.0) * mpad_ref[...]  # ReLU + zero halo ring

    # ---- conv2 (3x3, SAME): one im2col MXU dot over the padded h1 slab ----
    cols2 = jnp.concatenate(
        [h1[:, kh * WP + kw: kh * WP + kw + L_OUT]
         for kh in range(KSIZE) for kw in range(KSIZE)], axis=0)
    h2 = jnp.dot(w2_ref[...], cols2, preferred_element_type=jnp.float32) + b2_ref[...]

    # ---- CALayer: masked global avg pool -> 1x1 -> ReLU -> 1x1 -> sigmoid ----
    pooled = jnp.sum(h2 * mval_ref[...], axis=1, keepdims=True) * (1.0 / (H * W))
    z = jnp.dot(wd_ref[...], pooled, preferred_element_type=jnp.float32) + bd_ref[...]
    z = jnp.maximum(z, 0.0)                                   # (C//r, 1)
    s = jnp.dot(wu_ref[...], z, preferred_element_type=jnp.float32) + bu_ref[...]
    s = 1.0 / (1.0 + jnp.exp(-s))                             # sigmoid, (C, 1)

    # ---- channel scale + residual (residual read from the slab interior) ----
    residual = x_slab[:, FRONT + SHIFT: FRONT + SHIFT + L_OUT]
    out_ref[0] = h2 * s + residual


def rcab_forward(x_nchw, params):
    w1, b1, w2, b2, wd, bd, wu, bu = params
    n, c, h, w = x_nchw.shape
    cr = c // REDUCTION
    assert (c, h, w) == (N_FEAT, H, W)

    # Single padded, row-strided, lane-dense, front-shifted input slab (N, C, L_IN).
    x = x_nchw.astype(jnp.float32)
    xpad = jnp.pad(x, ((0, 0), (0, 0), (PAD, PAD), (PAD, PAD)))
    x_slab = jnp.pad(xpad.reshape(n, c, HP * WP),
                     ((0, 0), (0, 0), (FRONT, L_IN - FRONT - HP * WP)))

    # Kernel-friendly weight layouts (no NCHW<->NHWC transposes inside the kernel).
    w1k = jnp.transpose(w1, (0, 2, 3, 1)).reshape(c, KSIZE * KSIZE * c)  # (Cout, 9*Cin)
    w2k = jnp.transpose(w2, (0, 2, 3, 1)).reshape(c, KSIZE * KSIZE * c)
    wdk = wd[:, :, 0, 0]                       # (C//r, C)
    wuk = wu[:, :, 0, 0]                       # (C, C//r)
    b1k = b1.reshape(c, 1)
    b2k = b2.reshape(c, 1)
    bdk = bd.reshape(cr, 1)
    buk = bu.reshape(c, 1)

    # Precomputed loop-invariant masks (avoid in-kernel integer div/mod).
    lp = jnp.arange(L_PAD)
    ph, pw = lp // WP, lp % WP
    mpad = (((ph >= PAD) & (ph < H + PAD) & (pw >= PAD) & (pw < W + PAD))
            .astype(jnp.float32).reshape(1, L_PAD))
    lo = jnp.arange(L_OUT)
    oh, ow = lo // WP, lo % WP
    mval = ((oh < H) & (ow < W)).astype(jnp.float32).reshape(1, L_OUT)

    out_slab = pl.pallas_call(
        rcab_kernel,
        out_shape=jax.ShapeDtypeStruct((n, c, L_OUT), jnp.float32),
        grid=(n,),
        in_specs=[
            pl.BlockSpec((1, c, L_IN), lambda i: (i, 0, 0)),
            pl.BlockSpec((c, KSIZE * KSIZE * c), lambda i: (0, 0)),
            pl.BlockSpec((c, 1), lambda i: (0, 0)),
            pl.BlockSpec((c, KSIZE * KSIZE * c), lambda i: (0, 0)),
            pl.BlockSpec((c, 1), lambda i: (0, 0)),
            pl.BlockSpec((cr, c), lambda i: (0, 0)),
            pl.BlockSpec((cr, 1), lambda i: (0, 0)),
            pl.BlockSpec((c, cr), lambda i: (0, 0)),
            pl.BlockSpec((c, 1), lambda i: (0, 0)),
            pl.BlockSpec((1, L_PAD), lambda i: (0, 0)),
            pl.BlockSpec((1, L_OUT), lambda i: (0, 0)),
        ],
        out_specs=pl.BlockSpec((1, c, L_OUT), lambda i: (i, 0, 0)),
        compiler_params=pltpu.CompilerParams(
            dimension_semantics=("parallel",)),   # shard batch across TCs on v7x
    )(x_slab, w1k, b1k, w2k, b2k, wdk, bdk, wuk, buk, mpad, mval)

    # Un-stride: lane h*WP + w of the slab holds output pixel (h, w).
    out = out_slab[:, :, :H * WP].reshape(n, c, H, WP)[:, :, :, :W]
    return out


def rcab_reference(x_nchw, params):
    """Pure-JAX reference (for correctness check only)."""
    w1, b1, w2, b2, wd, bd, wu, bu = params
    x = jnp.transpose(x_nchw, (0, 2, 3, 1)).astype(jnp.float32)
    dn = ('NHWC', 'HWIO', 'NHWC')
    k1 = jnp.transpose(w1, (2, 3, 1, 0))
    k2 = jnp.transpose(w2, (2, 3, 1, 0))
    h1 = jax.lax.conv_general_dilated(x, k1, (1, 1), 'SAME', dimension_numbers=dn) + b1
    h1 = jnp.maximum(h1, 0.0)
    h2 = jax.lax.conv_general_dilated(h1, k2, (1, 1), 'SAME', dimension_numbers=dn) + b2
    pooled = jnp.mean(h2, axis=(1, 2), keepdims=True)                   # (N,1,1,C)
    z = jnp.maximum(jnp.einsum('nhwc,dc->nhwd', pooled, wd[:, :, 0, 0]) + bd, 0.0)
    s = jax.nn.sigmoid(jnp.einsum('nhwd,cd->nhwc', z, wu[:, :, 0, 0]) + bu)
    out = h2 * s + x
    return jnp.transpose(out, (0, 3, 1, 2))


def make_params(key, c=N_FEAT, r=REDUCTION, k=KSIZE):
    keys = jax.random.split(key, 8)
    cr = c // r
    w1 = 0.1 * jax.random.normal(keys[0], (c, c, k, k), jnp.float32)    # PyTorch (out,in,kh,kw)
    b1 = 0.1 * jax.random.normal(keys[1], (c,), jnp.float32)
    w2 = 0.1 * jax.random.normal(keys[2], (c, c, k, k), jnp.float32)
    b2 = 0.1 * jax.random.normal(keys[3], (c,), jnp.float32)
    wd = 0.1 * jax.random.normal(keys[4], (cr, c, 1, 1), jnp.float32)    # squeeze 1x1 conv
    bd = 0.1 * jax.random.normal(keys[5], (cr,), jnp.float32)
    wu = 0.1 * jax.random.normal(keys[6], (c, cr, 1, 1), jnp.float32)    # excite 1x1 conv
    bu = 0.1 * jax.random.normal(keys[7], (c,), jnp.float32)
    return (w1, b1, w2, b2, wd, bd, wu, bu)


if __name__ == "__main__":
    key = jax.random.PRNGKey(0)
    kx, kp = jax.random.split(key)
    x = jax.random.normal(kx, (BATCH, N_FEAT, H, W), jnp.float32)        # NCHW like PyTorch
    params = make_params(kp)

    out = jax.block_until_ready(rcab_forward(x, params))
    ref = jax.block_until_ready(rcab_reference(x, params))

    assert out.shape == x.shape, (out.shape, x.shape)
    err = float(jnp.max(jnp.abs(out - ref)))
    assert jnp.allclose(out, ref, atol=1e-4, rtol=1e-4), err
    print("KERNEL_OK")
</pallas_src>

<mosaic_0001>
module attributes {stable_mosaic.version = 11 : i64} {
  func.func @rcab_kernel(%arg0: i32, %arg1: memref<1x16x512xf32, #tpu.memory_space<vmem>>, %arg2: memref<16x144xf32, #tpu.memory_space<vmem>>, %arg3: memref<16x1xf32, #tpu.memory_space<vmem>>, %arg4: memref<16x144xf32, #tpu.memory_space<vmem>>, %arg5: memref<16x1xf32, #tpu.memory_space<vmem>>, %arg6: memref<4x16xf32, #tpu.memory_space<vmem>>, %arg7: memref<4x1xf32, #tpu.memory_space<vmem>>, %arg8: memref<16x4xf32, #tpu.memory_space<vmem>>, %arg9: memref<16x1xf32, #tpu.memory_space<vmem>>, %arg10: memref<1x422xf32, #tpu.memory_space<vmem>>, %arg11: memref<1x384xf32, #tpu.memory_space<vmem>>, %arg12: memref<1x16x384xf32, #tpu.memory_space<vmem>>) attributes {dimension_semantics = [#tpu.dimension_semantics<parallel>], iteration_bounds = array<i64: 2>, scalar_prefetch = 0 : i64, scratch_operands = 0 : i64, tpu.core_type = #tpu.core_type<tc>, window_params = [{transform_indices = @transform_0, window_bounds = array<i64: 1, 16, 512>}, {pipeline_mode = #tpu.pipeline_mode<synchronous>, transform_indices = @transform_1, window_bounds = array<i64: 16, 144>}, {pipeline_mode = #tpu.pipeline_mode<synchronous>, transform_indices = @transform_2, window_bounds = array<i64: 16, 1>}, {pipeline_mode = #tpu.pipeline_mode<synchronous>, transform_indices = @transform_3, window_bounds = array<i64: 16, 144>}, {pipeline_mode = #tpu.pipeline_mode<synchronous>, transform_indices = @transform_4, window_bounds = array<i64: 16, 1>}, {pipeline_mode = #tpu.pipeline_mode<synchronous>, transform_indices = @transform_5, window_bounds = array<i64: 4, 16>}, {pipeline_mode = #tpu.pipeline_mode<synchronous>, transform_indices = @transform_6, window_bounds = array<i64: 4, 1>}, {pipeline_mode = #tpu.pipeline_mode<synchronous>, transform_indices = @transform_7, window_bounds = array<i64: 16, 4>}, {pipeline_mode = #tpu.pipeline_mode<synchronous>, transform_indices = @transform_8, window_bounds = array<i64: 16, 1>}, {pipeline_mode = #tpu.pipeline_mode<synchronous>, transform_indices = @transform_9, window_bounds = array<i64: 1, 422>}, {pipeline_mode = #tpu.pipeline_mode<synchronous>, transform_indices = @transform_10, window_bounds = array<i64: 1, 384>}, {transform_indices = @transform_11, window_bounds = array<i64: 1, 16, 384>}]} {
    %c0 = arith.constant 0 : index
    %c0_0 = arith.constant 0 : index
    %c0_1 = arith.constant 0 : index
    %0 = vector.load %arg1[%c0, %c0_0, %c0_1] : memref<1x16x512xf32, #tpu.memory_space<vmem>>, vector<1x16x512xf32>
    %1 = vector.shape_cast %0 : vector<1x16x512xf32> to vector<16x512xf32>
    %2 = vector.extract_strided_slice %1 {offsets = [0, 0], sizes = [16, 422], strides = [1, 1]} : vector<16x512xf32> to vector<16x422xf32>
    %3 = vector.extract_strided_slice %1 {offsets = [0, 1], sizes = [16, 422], strides = [1, 1]} : vector<16x512xf32> to vector<16x422xf32>
    %4 = vector.extract_strided_slice %1 {offsets = [0, 2], sizes = [16, 422], strides = [1, 1]} : vector<16x512xf32> to vector<16x422xf32>
    %5 = vector.extract_strided_slice %1 {offsets = [0, 18], sizes = [16, 422], strides = [1, 1]} : vector<16x512xf32> to vector<16x422xf32>
    %6 = vector.extract_strided_slice %1 {offsets = [0, 19], sizes = [16, 422], strides = [1, 1]} : vector<16x512xf32> to vector<16x422xf32>
    %7 = vector.extract_strided_slice %1 {offsets = [0, 20], sizes = [16, 422], strides = [1, 1]} : vector<16x512xf32> to vector<16x422xf32>
    %8 = vector.extract_strided_slice %1 {offsets = [0, 36], sizes = [16, 422], strides = [1, 1]} : vector<16x512xf32> to vector<16x422xf32>
    %9 = vector.extract_strided_slice %1 {offsets = [0, 37], sizes = [16, 422], strides = [1, 1]} : vector<16x512xf32> to vector<16x422xf32>
    %10 = vector.extract_strided_slice %1 {offsets = [0, 38], sizes = [16, 422], strides = [1, 1]} : vector<16x512xf32> to vector<16x422xf32>
    %11 = tpu.concatenate %2, %3, %4, %5, %6, %7, %8, %9, %10 in 0 : vector<16x422xf32>, vector<16x422xf32>, vector<16x422xf32>, vector<16x422xf32>, vector<16x422xf32>, vector<16x422xf32>, vector<16x422xf32>, vector<16x422xf32>, vector<16x422xf32> -> vector<144x422xf32>
    %c0_2 = arith.constant 0 : index
    %c0_3 = arith.constant 0 : index
    %12 = vector.load %arg2[%c0_2, %c0_3] : memref<16x144xf32, #tpu.memory_space<vmem>>, vector<16x144xf32>
    %cst = arith.constant dense<0.000000e+00> : vector<16x422xf32>
    %13 = tpu.matmul %12, %11, %cst {dimension_numbers = #tpu.dot_dimension_numbers<[1], [0], [0], [1], [0, 0, 1, 1], [], []>} : vector<16x144xf32>, vector<144x422xf32>, vector<16x422xf32> -> vector<16x422xf32>
    %c0_4 = arith.constant 0 : index
    %c0_5 = arith.constant 0 : index
    %14 = vector.load %arg3[%c0_4, %c0_5] : memref<16x1xf32, #tpu.memory_space<vmem>>, vector<16x1xf32>
    %15 = vector.broadcast %14 : vector<16x1xf32> to vector<16x422xf32>
    %16 = arith.addf %13, %15 : vector<16x422xf32>
    %cst_6 = arith.constant 0.000000e+00 : f32
    %17 = vector.broadcast %cst_6 : f32 to vector<16x422xf32>
    %18 = arith.maximumf %16, %17 : vector<16x422xf32>
    %c0_7 = arith.constant 0 : index
    %c0_8 = arith.constant 0 : index
    %19 = vector.load %arg10[%c0_7, %c0_8] : memref<1x422xf32, #tpu.memory_space<vmem>>, vector<1x422xf32>
    %20 = vector.broadcast %19 : vector<1x422xf32> to vector<16x422xf32>
    %21 = arith.mulf %18, %20 : vector<16x422xf32>
    %22 = vector.extract_strided_slice %21 {offsets = [0, 0], sizes = [16, 384], strides = [1, 1]} : vector<16x422xf32> to vector<16x384xf32>
    %23 = vector.extract_strided_slice %21 {offsets = [0, 1], sizes = [16, 384], strides = [1, 1]} : vector<16x422xf32> to vector<16x384xf32>
    %24 = vector.extract_strided_slice %21 {offsets = [0, 2], sizes = [16, 384], strides = [1, 1]} : vector<16x422xf32> to vector<16x384xf32>
    %25 = vector.extract_strided_slice %21 {offsets = [0, 18], sizes = [16, 384], strides = [1, 1]} : vector<16x422xf32> to vector<16x384xf32>
    %26 = vector.extract_strided_slice %21 {offsets = [0, 19], sizes = [16, 384], strides = [1, 1]} : vector<16x422xf32> to vector<16x384xf32>
    %27 = vector.extract_strided_slice %21 {offsets = [0, 20], sizes = [16, 384], strides = [1, 1]} : vector<16x422xf32> to vector<16x384xf32>
    %28 = vector.extract_strided_slice %21 {offsets = [0, 36], sizes = [16, 384], strides = [1, 1]} : vector<16x422xf32> to vector<16x384xf32>
    %29 = vector.extract_strided_slice %21 {offsets = [0, 37], sizes = [16, 384], strides = [1, 1]} : vector<16x422xf32> to vector<16x384xf32>
    %30 = vector.extract_strided_slice %21 {offsets = [0, 38], sizes = [16, 384], strides = [1, 1]} : vector<16x422xf32> to vector<16x384xf32>
    %31 = tpu.concatenate %22, %23, %24, %25, %26, %27, %28, %29, %30 in 0 : vector<16x384xf32>, vector<16x384xf32>, vector<16x384xf32>, vector<16x384xf32>, vector<16x384xf32>, vector<16x384xf32>, vector<16x384xf32>, vector<16x384xf32>, vector<16x384xf32> -> vector<144x384xf32>
    %c0_9 = arith.constant 0 : index
    %c0_10 = arith.constant 0 : index
    %32 = vector.load %arg4[%c0_9, %c0_10] : memref<16x144xf32, #tpu.memory_space<vmem>>, vector<16x144xf32>
    %cst_11 = arith.constant dense<0.000000e+00> : vector<16x384xf32>
    %33 = tpu.matmul %32, %31, %cst_11 {dimension_numbers = #tpu.dot_dimension_numbers<[1], [0], [0], [1], [0, 0, 1, 1], [], []>} : vector<16x144xf32>, vector<144x384xf32>, vector<16x384xf32> -> vector<16x384xf32>
    %c0_12 = arith.constant 0 : index
    %c0_13 = arith.constant 0 : index
    %34 = vector.load %arg5[%c0_12, %c0_13] : memref<16x1xf32, #tpu.memory_space<vmem>>, vector<16x1xf32>
    %35 = vector.broadcast %34 : vector<16x1xf32> to vector<16x384xf32>
    %36 = arith.addf %33, %35 : vector<16x384xf32>
    %c0_14 = arith.constant 0 : index
    %c0_15 = arith.constant 0 : index
    %37 = vector.load %arg11[%c0_14, %c0_15] : memref<1x384xf32, #tpu.memory_space<vmem>>, vector<1x384xf32>
    %38 = vector.broadcast %37 : vector<1x384xf32> to vector<16x384xf32>
    %39 = arith.mulf %36, %38 : vector<16x384xf32>
    %cst_16 = arith.constant dense<0.000000e+00> : vector<16xf32>
    %40 = vector.multi_reduction <add>, %39, %cst_16 [1] : vector<16x384xf32> to vector<16xf32>
    %41 = vector.shape_cast %40 : vector<16xf32> to vector<16x1xf32>
    %cst_17 = arith.constant 3.906250e-03 : f32
    %42 = vector.broadcast %cst_17 : f32 to vector<16x1xf32>
    %43 = arith.mulf %41, %42 : vector<16x1xf32>
    %c0_18 = arith.constant 0 : index
    %c0_19 = arith.constant 0 : index
    %44 = vector.load %arg6[%c0_18, %c0_19] : memref<4x16xf32, #tpu.memory_space<vmem>>, vector<4x16xf32>
    %cst_20 = arith.constant dense<0.000000e+00> : vector<4x1xf32>
    %45 = tpu.matmul %44, %43, %cst_20 {dimension_numbers = #tpu.dot_dimension_numbers<[1], [0], [0], [1], [0, 0, 1, 1], [], []>} : vector<4x16xf32>, vector<16x1xf32>, vector<4x1xf32> -> vector<4x1xf32>
    %c0_21 = arith.constant 0 : index
    %c0_22 = arith.constant 0 : index
    %46 = vector.load %arg7[%c0_21, %c0_22] : memref<4x1xf32, #tpu.memory_space<vmem>>, vector<4x1xf32>
    %47 = arith.addf %45, %46 : vector<4x1xf32>
    %cst_23 = arith.constant 0.000000e+00 : f32
    %48 = vector.broadcast %cst_23 : f32 to vector<4x1xf32>
    %49 = arith.maximumf %47, %48 : vector<4x1xf32>
    %c0_24 = arith.constant 0 : index
    %c0_25 = arith.constant 0 : index
    %50 = vector.load %arg8[%c0_24, %c0_25] : memref<16x4xf32, #tpu.memory_space<vmem>>, vector<16x4xf32>
    %cst_26 = arith.constant dense<0.000000e+00> : vector<16x1xf32>
    %51 = tpu.matmul %50, %49, %cst_26 {dimension_numbers = #tpu.dot_dimension_numbers<[1], [0], [0], [1], [0, 0, 1, 1], [], []>} : vector<16x4xf32>, vector<4x1xf32>, vector<16x1xf32> -> vector<16x1xf32>
    %c0_27 = arith.constant 0 : index
    %c0_28 = arith.constant 0 : index
    %52 = vector.load %arg9[%c0_27, %c0_28] : memref<16x1xf32, #tpu.memory_space<vmem>>, vector<16x1xf32>
    %53 = arith.addf %51, %52 : vector<16x1xf32>
    %cst_29 = arith.constant 0.000000e+00 : f32
    %54 = vector.broadcast %cst_29 : f32 to vector<16x1xf32>
    %55 = arith.subf %54, %53 : vector<16x1xf32>
    %56 = math.exp %55 : vector<16x1xf32>
    %cst_30 = arith.constant 1.000000e+00 : f32
    %57 = vector.broadcast %cst_30 : f32 to vector<16x1xf32>
    %58 = arith.addf %57, %56 : vector<16x1xf32>
    %cst_31 = arith.constant 1.000000e+00 : f32
    %59 = vector.broadcast %cst_31 : f32 to vector<16x1xf32>
    %60 = arith.divf %59, %58 : vector<16x1xf32>
    %61 = vector.extract_strided_slice %1 {offsets = [0, 38], sizes = [16, 384], strides = [1, 1]} : vector<16x512xf32> to vector<16x384xf32>
    %62 = vector.broadcast %60 : vector<16x1xf32> to vector<16x384xf32>
    %63 = arith.mulf %36, %62 : vector<16x384xf32>
    %64 = arith.addf %63, %61 : vector<16x384xf32>
    %c0_32 = arith.constant 0 : index
    %c0_33 = arith.constant 0 : index
    %c0_34 = arith.constant 0 : index
    %65 = vector.load %arg12[%c0_32, %c0_33, %c0_34] : memref<1x16x384xf32, #tpu.memory_space<vmem>>, vector<1x16x384xf32>
    %66 = vector.shape_cast %65 : vector<1x16x384xf32> to vector<16x384xf32>
    %67 = vector.shape_cast %64 : vector<16x384xf32> to vector<1x16x384xf32>
    tpu.vector_store %arg12[%c0_32, %c0_33, %c0_34], %67 {strides = array<i32>} : memref<1x16x384xf32, #tpu.memory_space<vmem>>, vector<1x16x384xf32>,
    return
  }
  func.func @transform_0(%arg0: i32) -> (i32, i32, i32) {
    %c0_i32 = arith.constant 0 : i32
    %c0_i32_0 = arith.constant 0 : i32
    %c0_i32_1 = arith.constant 0 : i32
    return %arg0, %c0_i32, %c0_i32_0 : i32, i32, i32
  }
  func.func @transform_1(%arg0: i32) -> (i32, i32) {
    %c0_i32 = arith.constant 0 : i32
    %c0_i32_0 = arith.constant 0 : i32
    %c0_i32_1 = arith.constant 0 : i32
    return %c0_i32, %c0_i32_0 : i32, i32
  }
  func.func @transform_2(%arg0: i32) -> (i32, i32) {
    %c0_i32 = arith.constant 0 : i32
    %c0_i32_0 = arith.constant 0 : i32
    %c0_i32_1 = arith.constant 0 : i32
    return %c0_i32, %c0_i32_0 : i32, i32
  }
  func.func @transform_3(%arg0: i32) -> (i32, i32) {
    %c0_i32 = arith.constant 0 : i32
    %c0_i32_0 = arith.constant 0 : i32
    %c0_i32_1 = arith.constant 0 : i32
    return %c0_i32, %c0_i32_0 : i32, i32
  }
  func.func @transform_4(%arg0: i32) -> (i32, i32) {
    %c0_i32 = arith.constant 0 : i32
    %c0_i32_0 = arith.constant 0 : i32
    %c0_i32_1 = arith.constant 0 : i32
    return %c0_i32, %c0_i32_0 : i32, i32
  }
  func.func @transform_5(%arg0: i32) -> (i32, i32) {
    %c0_i32 = arith.constant 0 : i32
    %c0_i32_0 = arith.constant 0 : i32
    %c0_i32_1 = arith.constant 0 : i32
    return %c0_i32, %c0_i32_0 : i32, i32
  }
  func.func @transform_6(%arg0: i32) -> (i32, i32) {
    %c0_i32 = arith.constant 0 : i32
    %c0_i32_0 = arith.constant 0 : i32
    %c0_i32_1 = arith.constant 0 : i32
    return %c0_i32, %c0_i32_0 : i32, i32
  }
  func.func @transform_7(%arg0: i32) -> (i32, i32) {
    %c0_i32 = arith.constant 0 : i32
    %c0_i32_0 = arith.constant 0 : i32
    %c0_i32_1 = arith.constant 0 : i32
    return %c0_i32, %c0_i32_0 : i32, i32
  }
  func.func @transform_8(%arg0: i32) -> (i32, i32) {
    %c0_i32 = arith.constant 0 : i32
    %c0_i32_0 = arith.constant 0 : i32
    %c0_i32_1 = arith.constant 0 : i32
    return %c0_i32, %c0_i32_0 : i32, i32
  }
  func.func @transform_9(%arg0: i32) -> (i32, i32) {
    %c0_i32 = arith.constant 0 : i32
    %c0_i32_0 = arith.constant 0 : i32
    %c0_i32_1 = arith.constant 0 : i32
    return %c0_i32, %c0_i32_0 : i32, i32
  }
  func.func @transform_10(%arg0: i32) -> (i32, i32) {
    %c0_i32 = arith.constant 0 : i32
    %c0_i32_0 = arith.constant 0 : i32
    %c0_i32_1 = arith.constant 0 : i32
    return %c0_i32, %c0_i32_0 : i32, i32
  }
  func.func @transform_11(%arg0: i32) -> (i32, i32, i32) {
    %c0_i32 = arith.constant 0 : i32
    %c0_i32_0 = arith.constant 0 : i32
    %c0_i32_1 = arith.constant 0 : i32
    return %arg0, %c0_i32, %c0_i32_0 : i32, i32, i32
  }
}

</mosaic_0001>

<llo_original>
// kernel: tpu_custom_call.1
$region0: #{tpu_custom_call.1}
  #allocation0 [shape = 'u32[]', space=smem, size = 0x4, offset = 0x4, fixed_abs, tag = 'smem constant byte address 0x4 - core index']
  #allocation1 [shape = 'u32[144,128]{1,0:T(1,128)}', space=vmem, size = 0x12000, scoped, tag = 'internal scratch']
  %s0 = inlined_call_operand.hbm [shape: f32[2,16,512], index: 0, kind: input, shape index: {}]
  %s1 = inlined_call_operand.vmem [shape: f32[16,144], index: 1, kind: input, shape index: {}]
  %s2 = inlined_call_operand.vmem [shape: f32[16,1], index: 2, kind: input, shape index: {}]
  %s3 = inlined_call_operand.vmem [shape: f32[16,144], index: 3, kind: input, shape index: {}]
  %s4 = inlined_call_operand.vmem [shape: f32[16,1], index: 4, kind: input, shape index: {}]
  %s5 = inlined_call_operand.vmem [shape: f32[4,16], index: 5, kind: input, shape index: {}]
  %s6 = inlined_call_operand.vmem [shape: f32[4,1], index: 6, kind: input, shape index: {}]
  %s7 = inlined_call_operand.vmem [shape: f32[16,4], index: 7, kind: input, shape index: {}]
  %s8 = inlined_call_operand.vmem [shape: f32[16,1], index: 8, kind: input, shape index: {}]
  %s9 = inlined_call_operand.vmem [shape: f32[1,422], index: 9, kind: input, shape index: {}]
  %s10 = inlined_call_operand.vmem [shape: f32[1,384], index: 10, kind: input, shape index: {}]
  %s11 = inlined_call_operand.hbm [shape: f32[2,16,384], index: 11, kind: output, shape index: {}]
  %s12 = sld [smem:[#allocation0]]
  $region81: #{tpu_custom_call.1} parent=0
    _
  %s14 = ssub.s32 1, %s12
  %s15 = scalar_select 0, %s14, %s12
  $region1: #{tpu_custom_call.1} parent=0
    #allocation2 [shape = 'u8[65536]{0}', space=vmem, size = 0x10000, scoped, tag = 'input window, operand 0']
    #allocation3 [shape = 's32[2]{0}', space=sflag, size = 0x8, scoped, tag = 'scoped memory for tpu_custom_call.1']
    #allocation4 [shape = 's32[2]{0}', space=sflag, size = 0x8, scoped, tag = 'scoped memory for tpu_custom_call.1']
    #allocation5 [shape = 'u8[49152]{0}', space=vmem, size = 0xc000, scoped, tag = 'output window, operand 0']
    %16 = vsyncpa [#allocation3], 0
    %s17 = scalar_lea.sflag [#allocation3], 1
    %18 = vsyncpa %s17, 0
    %19 = vsyncpa [#allocation4], 0
    %s20 = scalar_lea.sflag [#allocation4], 1
    %21 = vsyncpa %s20, 0
    loop: start=0, step=1, limit=4
    $region2: #{tpu_custom_call.1} parent=1 // loop_pre_header
      _
    $region3: #{tpu_custom_call.1} parent=1 // loop_header
      %s23 = sphi 0, %s27
      %p24 = scmp.ge.s32.totalorder %s23, 4
      %s33 = sphi 0, %s35
      %s36 = sphi 0, %s33
      %s37 = sphi 0, %s36
      %s53 = sphi 0, %s37
      %s57 = sphi 0, %s57
      %s59 = sphi 0, %s57
      %s60 = sphi 0, %s59
      %s74 = sphi 0, %s60
      %s78 = sphi 0, %s78
      %s80 = sphi 0, %s78
      %s81 = sphi 0, %s80
      %s95 = sphi 0, %s81
      %s99 = sphi 0, %s99
      %s101 = sphi 0, %s99
      %s102 = sphi 0, %s101
      %s116 = sphi 0, %s102
      %s120 = sphi 0, %s120
      %s122 = sphi 0, %s120
      %s123 = sphi 0, %s122
      %s137 = sphi 0, %s123
      %s141 = sphi 0, %s141
      %s143 = sphi 0, %s141
      %s144 = sphi 0, %s143
      %s158 = sphi 0, %s144
      %s162 = sphi 0, %s162
      %s164 = sphi 0, %s162
      %s165 = sphi 0, %s164
      %s179 = sphi 0, %s165
      %s183 = sphi 0, %s183
      %s185 = sphi 0, %s183
      %s186 = sphi 0, %s185
      %s200 = sphi 0, %s186
      %s204 = sphi 0, %s204
      %s206 = sphi 0, %s204
      %s207 = sphi 0, %s206
      %s221 = sphi 0, %s207
      %s225 = sphi 0, %s225
      %s227 = sphi 0, %s225
      %s228 = sphi 0, %s227
      %s242 = sphi 0, %s228
      %s246 = sphi 0, %s246
      %s248 = sphi 0, %s246
      %s249 = sphi 0, %s248
      %s263 = sphi 0, %s249
      %s269 = sphi 0, %s271
      %s272 = sphi 0, %s269
      %s273 = sphi 0, %s272
      %s289 = sphi 0, %s273
    $region4: #{tpu_custom_call.1} parent=1 // loop_header_branch
      %26 = sbr.rel (%p24) target = $region8
    $region5: #{tpu_custom_call.1} parent=1 // loop_body
      %s28 = ssub.s32 %s23, 1
      %s29 = ssub.s32 %s23, 2
      %s30 = sadd.s32 %s23, 1
      %s31 = ssub.s32 %s23, %s30
      %p32 = scmp.eq.s32.totalorder %s31, 0
      %s34 = sadd.s32 %s33, 1
      %s35 = scalar_select %p32, %s33, %s34
      %p38 = pneg %p32
      %p39 = scmp.eq.s32.totalorder %s23, 1
      %p40 = por %p38, %p39
      %p41 = scmp.ne.s32.totalorder %s33, %s36
      %p42 = scmp.eq.s32.totalorder %s23, 0
      %p43 = por %p41, %p42
      %p44 = scmp.ne.s32.totalorder %s33, %s36
      %p45 = scmp.eq.s32.totalorder %s28, 1
      %p46 = por %p44, %p45
      %p47 = scmp.ne.s32.totalorder %s36, %s37
      %p48 = scmp.eq.s32.totalorder %s28, 0
      %p49 = por %p47, %p48
      %p50 = scmp.ne.s32.totalorder %s36, %s37
      %p51 = scmp.eq.s32.totalorder %s29, 1
      %p52 = por %p50, %p51
      %p54 = scmp.ne.s32.totalorder %s37, %s53
      %p55 = scmp.eq.s32.totalorder %s29, 0
      %p56 = por %p54, %p55
      %s58 = sadd.s32 %s57, 1
      %p61 = scmp.eq.s32.totalorder %s23, 1
      %p62 = scmp.ne.s32.totalorder %s57, %s59
      %p63 = scmp.eq.s32.totalorder %s23, 0
      %p64 = por %p62, %p63
      %p65 = scmp.ne.s32.totalorder %s57, %s59
      %p66 = scmp.eq.s32.totalorder %s28, 1
      %p67 = por %p65, %p66
      %p68 = scmp.ne.s32.totalorder %s59, %s60
      %p69 = scmp.eq.s32.totalorder %s28, 0
      %p70 = por %p68, %p69
      %p71 = scmp.ne.s32.totalorder %s59, %s60
      %p72 = scmp.eq.s32.totalorder %s29, 1
      %p73 = por %p71, %p72
      %p75 = scmp.ne.s32.totalorder %s60, %s74
      %p76 = scmp.eq.s32.totalorder %s29, 0
      %p77 = por %p75, %p76
      %s79 = sadd.s32 %s78, 1
      %p82 = scmp.eq.s32.totalorder %s23, 1
      %p83 = scmp.ne.s32.totalorder %s78, %s80
      %p84 = scmp.eq.s32.totalorder %s23, 0
      %p85 = por %p83, %p84
      %p86 = scmp.ne.s32.totalorder %s78, %s80
      %p87 = scmp.eq.s32.totalorder %s28, 1
      %p88 = por %p86, %p87
      %p89 = scmp.ne.s32.totalorder %s80, %s81
      %p90 = scmp.eq.s32.totalorder %s28, 0
      %p91 = por %p89, %p90
      %p92 = scmp.ne.s32.totalorder %s80, %s81
      %p93 = scmp.eq.s32.totalorder %s29, 1
      %p94 = por %p92, %p93
      %p96 = scmp.ne.s32.totalorder %s81, %s95
      %p97 = scmp.eq.s32.totalorder %s29, 0
      %p98 = por %p96, %p97
      %s100 = sadd.s32 %s99, 1
      %p103 = scmp.eq.s32.totalorder %s23, 1
      %p104 = scmp.ne.s32.totalorder %s99, %s101
      %p105 = scmp.eq.s32.totalorder %s23, 0
      %p106 = por %p104, %p105
      %p107 = scmp.ne.s32.totalorder %s99, %s101
      %p108 = scmp.eq.s32.totalorder %s28, 1
      %p109 = por %p107, %p108
      %p110 = scmp.ne.s32.totalorder %s101, %s102
      %p111 = scmp.eq.s32.totalorder %s28, 0
      %p112 = por %p110, %p111
      %p113 = scmp.ne.s32.totalorder %s101, %s102
      %p114 = scmp.eq.s32.totalorder %s29, 1
      %p115 = por %p113, %p114
      %p117 = scmp.ne.s32.totalorder %s102, %s116
      %p118 = scmp.eq.s32.totalorder %s29, 0
      %p119 = por %p117, %p118
      %s121 = sadd.s32 %s120, 1
      %p124 = scmp.eq.s32.totalorder %s23, 1
      %p125 = scmp.ne.s32.totalorder %s120, %s122
      %p126 = scmp.eq.s32.totalorder %s23, 0
      %p127 = por %p125, %p126
      %p128 = scmp.ne.s32.totalorder %s120, %s122
      %p129 = scmp.eq.s32.totalorder %s28, 1
      %p130 = por %p128, %p129
      %p131 = scmp.ne.s32.totalorder %s122, %s123
      %p132 = scmp.eq.s32.totalorder %s28, 0
      %p133 = por %p131, %p132
      %p134 = scmp.ne.s32.totalorder %s122, %s123
      %p135 = scmp.eq.s32.totalorder %s29, 1
      %p136 = por %p134, %p135
      %p138 = scmp.ne.s32.totalorder %s123, %s137
      %p139 = scmp.eq.s32.totalorder %s29, 0
      %p140 = por %p138, %p139
      %s142 = sadd.s32 %s141, 1
      %p145 = scmp.eq.s32.totalorder %s23, 1
      %p146 = scmp.ne.s32.totalorder %s141, %s143
      %p147 = scmp.eq.s32.totalorder %s23, 0
      %p148 = por %p146, %p147
      %p149 = scmp.ne.s32.totalorder %s141, %s143
      %p150 = scmp.eq.s32.totalorder %s28, 1
      %p151 = por %p149, %p150
      %p152 = scmp.ne.s32.totalorder %s143, %s144
      %p153 = scmp.eq.s32.totalorder %s28, 0
      %p154 = por %p152, %p153
      %p155 = scmp.ne.s32.totalorder %s143, %s144
      %p156 = scmp.eq.s32.totalorder %s29, 1
      %p157 = por %p155, %p156
      %p159 = scmp.ne.s32.totalorder %s144, %s158
      %p160 = scmp.eq.s32.totalorder %s29, 0
      %p161 = por %p159, %p160
      %s163 = sadd.s32 %s162, 1
      %p166 = scmp.eq.s32.totalorder %s23, 1
      %p167 = scmp.ne.s32.totalorder %s162, %s164
      %p168 = scmp.eq.s32.totalorder %s23, 0
      %p169 = por %p167, %p168
      %p170 = scmp.ne.s32.totalorder %s162, %s164
      %p171 = scmp.eq.s32.totalorder %s28, 1
      %p172 = por %p170, %p171
      %p173 = scmp.ne.s32.totalorder %s164, %s165
      %p174 = scmp.eq.s32.totalorder %s28, 0
      %p175 = por %p173, %p174
      %p176 = scmp.ne.s32.totalorder %s164, %s165
      %p177 = scmp.eq.s32.totalorder %s29, 1
      %p178 = por %p176, %p177
      %p180 = scmp.ne.s32.totalorder %s165, %s179
      %p181 = scmp.eq.s32.totalorder %s29, 0
      %p182 = por %p180, %p181
      %s184 = sadd.s32 %s183, 1
      %p187 = scmp.eq.s32.totalorder %s23, 1
      %p188 = scmp.ne.s32.totalorder %s183, %s185
      %p189 = scmp.eq.s32.totalorder %s23, 0
      %p190 = por %p188, %p189
      %p191 = scmp.ne.s32.totalorder %s183, %s185
      %p192 = scmp.eq.s32.totalorder %s28, 1
      %p193 = por %p191, %p192
      %p194 = scmp.ne.s32.totalorder %s185, %s186
      %p195 = scmp.eq.s32.totalorder %s28, 0
      %p196 = por %p194, %p195
      %p197 = scmp.ne.s32.totalorder %s185, %s186
      %p198 = scmp.eq.s32.totalorder %s29, 1
      %p199 = por %p197, %p198
      %p201 = scmp.ne.s32.totalorder %s186, %s200
      %p202 = scmp.eq.s32.totalorder %s29, 0
      %p203 = por %p201, %p202
      %s205 = sadd.s32 %s204, 1
      %p208 = scmp.eq.s32.totalorder %s23, 1
      %p209 = scmp.ne.s32.totalorder %s204, %s206
      %p210 = scmp.eq.s32.totalorder %s23, 0
      %p211 = por %p209, %p210
      %p212 = scmp.ne.s32.totalorder %s204, %s206
      %p213 = scmp.eq.s32.totalorder %s28, 1
      %p214 = por %p212, %p213
      %p215 = scmp.ne.s32.totalorder %s206, %s207
      %p216 = scmp.eq.s32.totalorder %s28, 0
      %p217 = por %p215, %p216
      %p218 = scmp.ne.s32.totalorder %s206, %s207
      %p219 = scmp.eq.s32.totalorder %s29, 1
      %p220 = por %p218, %p219
      %p222 = scmp.ne.s32.totalorder %s207, %s221
      %p223 = scmp.eq.s32.totalorder %s29, 0
      %p224 = por %p222, %p223
      %s226 = sadd.s32 %s225, 1
      %p229 = scmp.eq.s32.totalorder %s23, 1
      %p230 = scmp.ne.s32.totalorder %s225, %s227
      %p231 = scmp.eq.s32.totalorder %s23, 0
      %p232 = por %p230, %p231
      %p233 = scmp.ne.s32.totalorder %s225, %s227
      %p234 = scmp.eq.s32.totalorder %s28, 1
      %p235 = por %p233, %p234
      %p236 = scmp.ne.s32.totalorder %s227, %s228
      %p237 = scmp.eq.s32.totalorder %s28, 0
      %p238 = por %p236, %p237
      %p239 = scmp.ne.s32.totalorder %s227, %s228
      %p240 = scmp.eq.s32.totalorder %s29, 1
      %p241 = por %p239, %p240
      %p243 = scmp.ne.s32.totalorder %s228, %s242
      %p244 = scmp.eq.s32.totalorder %s29, 0
      %p245 = por %p243, %p244
      %s247 = sadd.s32 %s246, 1
      %p250 = scmp.eq.s32.totalorder %s23, 1
      %p251 = scmp.ne.s32.totalorder %s246, %s248
      %p252 = scmp.eq.s32.totalorder %s23, 0
      %p253 = por %p251, %p252
      %p254 = scmp.ne.s32.totalorder %s246, %s248
      %p255 = scmp.eq.s32.totalorder %s28, 1
      %p256 = por %p254, %p255
      %p257 = scmp.ne.s32.totalorder %s248, %s249
      %p258 = scmp.eq.s32.totalorder %s28, 0
      %p259 = por %p257, %p258
      %p260 = scmp.ne.s32.totalorder %s248, %s249
      %p261 = scmp.eq.s32.totalorder %s29, 1
      %p262 = por %p260, %p261
      %p264 = scmp.ne.s32.totalorder %s249, %s263
      %p265 = scmp.eq.s32.totalorder %s29, 0
      %p266 = por %p264, %p265
      %s267 = ssub.s32 %s23, %s30
      %p268 = scmp.eq.s32.totalorder %s267, 0
      %s270 = sadd.s32 %s269, 1
      %s271 = scalar_select %p268, %s269, %s270
      %p274 = pneg %p268
      %p275 = scmp.eq.s32.totalorder %s23, 1
      %p276 = por %p274, %p275
      %p277 = scmp.ne.s32.totalorder %s269, %s272
      %p278 = scmp.eq.s32.totalorder %s23, 0
      %p279 = por %p277, %p278
      %p280 = scmp.ne.s32.totalorder %s269, %s272
      %p281 = scmp.eq.s32.totalorder %s28, 1
      %p282 = por %p280, %p281
      %p283 = scmp.ne.s32.totalorder %s272, %s273
      %p284 = scmp.eq.s32.totalorder %s28, 0
      %p285 = por %p283, %p284
      %p286 = scmp.ne.s32.totalorder %s272, %s273
      %p287 = scmp.eq.s32.totalorder %s29, 1
      %p288 = por %p286, %p287
      %p290 = scmp.ne.s32.totalorder %s273, %s289
      %p291 = scmp.eq.s32.totalorder %s29, 0
      %p292 = por %p290, %p291
      %p293 = scmp.le.s32.totalorder 1, %s23
      %p294 = scmp.lt.s32.totalorder %s23, 3
      %p295 = pnand %p293, %p294
      %p296 = pneg %p295
      // Predicated region
      $region9: #{tpu_custom_call.1} parent=5 // pred_check
        _
      $region10: #{tpu_custom_call.1} parent=5 // pred_check_branch
        %298 = sbr.rel (%p295) target = $region12
      $region11: #{tpu_custom_call.1} parent=5 // pred_region
        %s299 = ssub.s32 %s23, 1
        // Predicated region
        $region13: #{tpu_custom_call.1} parent=11 // pred_check
          %p300 = pneg %p70
        $region14: #{tpu_custom_call.1} parent=11 // pred_check_branch
          %302 = sbr.rel (%p300) target = $region16
        $region15: #{tpu_custom_call.1} parent=11 // pred_region
          _
        $region16: #{tpu_custom_call.1} parent=11 // pred_fallthru
          _
        // Predicated region
        $region17: #{tpu_custom_call.1} parent=11 // pred_check
          %p303 = pneg %p91
        $region18: #{tpu_custom_call.1} parent=11 // pred_check_branch
          %305 = sbr.rel (%p303) target = $region20
        $region19: #{tpu_custom_call.1} parent=11 // pred_region
          _
        $region20: #{tpu_custom_call.1} parent=11 // pred_fallthru
          _
        // Predicated region
        $region21: #{tpu_custom_call.1} parent=11 // pred_check
          %p306 = pneg %p112
        $region22: #{tpu_custom_call.1} parent=11 // pred_check_branch
          %308 = sbr.rel (%p306) target = $region24
        $region23: #{tpu_custom_call.1} parent=11 // pred_region
          _
        $region24: #{tpu_custom_call.1} parent=11 // pred_fallthru
          _
        // Predicated region
        $region25: #{tpu_custom_call.1} parent=11 // pred_check
          %p309 = pneg %p133
        $region26: #{tpu_custom_call.1} parent=11 // pred_check_branch
          %311 = sbr.rel (%p309) target = $region28
        $region27: #{tpu_custom_call.1} parent=11 // pred_region
          _
        $region28: #{tpu_custom_call.1} parent=11 // pred_fallthru
          _
        // Predicated region
        $region29: #{tpu_custom_call.1} parent=11 // pred_check
          %p312 = pneg %p154
        $region30: #{tpu_custom_call.1} parent=11 // pred_check_branch
          %314 = sbr.rel (%p312) target = $region32
        $region31: #{tpu_custom_call.1} parent=11 // pred_region
          _
        $region32: #{tpu_custom_call.1} parent=11 // pred_fallthru
          _
        // Predicated region
        $region33: #{tpu_custom_call.1} parent=11 // pred_check
          %p315 = pneg %p175
        $region34: #{tpu_custom_call.1} parent=11 // pred_check_branch
          %317 = sbr.rel (%p315) target = $region36
        $region35: #{tpu_custom_call.1} parent=11 // pred_region
          _
        $region36: #{tpu_custom_call.1} parent=11 // pred_fallthru
          _
        // Predicated region
        $region37: #{tpu_custom_call.1} parent=11 // pred_check
          %p318 = pneg %p196
        $region38: #{tpu_custom_call.1} parent=11 // pred_check_branch
          %320 = sbr.rel (%p318) target = $region40
        $region39: #{tpu_custom_call.1} parent=11 // pred_region
          _
        $region40: #{tpu_custom_call.1} parent=11 // pred_fallthru
          _
        // Predicated region
        $region41: #{tpu_custom_call.1} parent=11 // pred_check
          %p321 = pneg %p217
        $region42: #{tpu_custom_call.1} parent=11 // pred_check_branch
          %323 = sbr.rel (%p321) target = $region44
        $region43: #{tpu_custom_call.1} parent=11 // pred_region
          _
        $region44: #{tpu_custom_call.1} parent=11 // pred_fallthru
          _
        // Predicated region
        $region45: #{tpu_custom_call.1} parent=11 // pred_check
          %p324 = pneg %p238
        $region46: #{tpu_custom_call.1} parent=11 // pred_check_branch
          %326 = sbr.rel (%p324) target = $region48
        $region47: #{tpu_custom_call.1} parent=11 // pred_region
          _
        $region48: #{tpu_custom_call.1} parent=11 // pred_fallthru
          _
        // Predicated region
        $region49: #{tpu_custom_call.1} parent=11 // pred_check
          %p327 = pneg %p259
        $region50: #{tpu_custom_call.1} parent=11 // pred_check_branch
          %329 = sbr.rel (%p327) target = $region52
        $region51: #{tpu_custom_call.1} parent=11 // pred_region
          _
        $region52: #{tpu_custom_call.1} parent=11 // pred_fallthru
          _
      $region12: #{tpu_custom_call.1} parent=5 // pred_fallthru
        _
      %p330 = scmp.lt.s32.totalorder %s23, 2
      // Predicated region
      $region53: #{tpu_custom_call.1} parent=5 // pred_check
        %p331 = pneg %p330
      $region54: #{tpu_custom_call.1} parent=5 // pred_check_branch
        %333 = sbr.rel (%p331) target = $region56
      $region55: #{tpu_custom_call.1} parent=5 // pred_region
        // Predicated region
        $region57: #{tpu_custom_call.1} parent=55 // pred_check
          %p334 = pneg %p43
        $region58: #{tpu_custom_call.1} parent=55 // pred_check_branch
          %336 = sbr.rel (%p334) target = $region60
        $region59: #{tpu_custom_call.1} parent=55 // pred_region
          %s337 = sand.u32 %s33, 1
          %s338 = scalar_lea.sflag [#allocation3], %s337
          %s339 = sand.u32 %s33, 1
          %s340 = smul.addr %s339, 64
          %s341 = scalar_lea.vmem [#allocation2], %s340
          %s343 = ssub.s32 1024, 1024
          %344 = vsyncadd %s338, %s343
          %s345 = smul.addr %s23, 8
          %s346 = smul.addr %s345, 128
          %s347 = scalar_lea.hbm %s0, %s346
          %s348 = sshll.u32 %s341, 4
          %s349 = int_to_ptr.vmem [resolvable:$true] %s348
          %354 = dma.hbm_to_vmem [thread:$0]  %s347, 1024, %s349, %s338, 512, 512, 32
        $region60: #{tpu_custom_call.1} parent=55 // pred_fallthru
          _
      $region56: #{tpu_custom_call.1} parent=5 // pred_fallthru
        _
      %p355 = scmp.le.s32.totalorder 1, %s23
      %p356 = scmp.lt.s32.totalorder %s23, 3
      %p357 = pnand %p355, %p356
      %p358 = pneg %p357
      // Predicated region
      $region61: #{tpu_custom_call.1} parent=5 // pred_check
        _
      $region62: #{tpu_custom_call.1} parent=5 // pred_check_branch
        %360 = sbr.rel (%p357) target = $region64
      $region63: #{tpu_custom_call.1} parent=5 // pred_region
        %s361 = ssub.s32 %s23, 1
        %s362 = sand.u32 %s36, 1
        %s363 = scalar_lea.sflag [#allocation3], %s362
        %s364 = sand.u32 %s36, 1
        %s365 = smul.addr %s364, 64
        %s366 = scalar_lea.vmem [#allocation2], %s365
        // Predicated region
        $region65: #{tpu_custom_call.1} parent=63 // pred_check
          %p367 = pneg %p49
        $region66: #{tpu_custom_call.1} parent=63 // pred_check_branch
          %369 = sbr.rel (%p367) target = $region68
        $region67: #{tpu_custom_call.1} parent=63 // pred_region
          %370 = dma.done %s363, 1024
        $region68: #{tpu_custom_call.1} parent=63 // pred_fallthru
          _
        %s371 = sand.u32 %s36, 1
        %s372 = scalar_lea.sflag [#allocation3], %s371
        %s373 = sand.u32 %s36, 1
        %s374 = smul.addr %s373, 64
        %s375 = scalar_lea.vmem [#allocation2], %s374
        %p376 = pneg %p49
        %p377 = pneg %p46
        %p378 = pneg %p70
        %p379 = pneg %p67
        %p380 = pneg %p91
        %p381 = pneg %p88
        %p382 = pneg %p112
        %p383 = pneg %p109
        %p384 = pneg %p133
        %p385 = pneg %p130
        %p386 = pneg %p154
        %p387 = pneg %p151
        %p388 = pneg %p175
        %p389 = pneg %p172
        %p390 = pneg %p196
        %p391 = pneg %p193
        %p392 = pneg %p217
        %p393 = pneg %p214
        %p394 = pneg %p238
        %p395 = pneg %p235
        %p396 = pneg %p259
        %p397 = pneg %p256
        %p398 = pneg %p285
        %p399 = pneg %p282
        %s400 = sand.u32 %s272, 1
        %s401 = scalar_lea.sflag [#allocation4], %s400
        %s402 = sand.u32 %s272, 1
        %s403 = smul.addr %s402, 48
        %s404 = scalar_lea.vmem [#allocation5], %s403
        %v405 = vld [vmem:[%s366] sm:$0xff]
        %v406 = vld [vmem:[%s366 + $0x8] sm:$0xff]
        %v407 = vld [vmem:[%s366 + $0x10] sm:$0xff]
        %v408 = vld [vmem:[%s366 + $0x18] sm:$0xff]
        %v409 = vld [vmem:[%s366 + $0x20] sm:$0xff]
        %v410 = vld [vmem:[%s366 + $0x28] sm:$0xff]
        %v411 = vld [vmem:[%s366 + $0x30] sm:$0xff]
        %v412 = vld [vmem:[%s366 + $0x38] sm:$0xff]
        %421 = vrot.lane.b32.xlu0 %v405, 127
        %v422 = vpop.permute.xlu0 %421
        %423 = vrot.lane.b32.xlu0 %v406, 127
        %v424 = vpop.permute.xlu0 %423
        %425 = vrot.lane.b32.xlu0 %v407, 127
        %v426 = vpop.permute.xlu0 %425
        %427 = vrot.lane.b32.xlu0 %v408, 127
        %v428 = vpop.permute.xlu0 %427
        %429 = vrot.lane.b32.xlu0 %v409, 127
        %v430 = vpop.permute.xlu0 %429
        %431 = vrot.lane.b32.xlu0 %v410, 127
        %v432 = vpop.permute.xlu0 %431
        %433 = vrot.lane.b32.xlu0 %v411, 127
        %v434 = vpop.permute.xlu0 %433
        %435 = vrot.lane.b32.xlu0 %v412, 127
        %v436 = vpop.permute.xlu0 %435
        %vm437 = vcmask 1039360
        %v438 = vsel %vm437, %v422, %v424
        %v439 = vsel %vm437, %v424, %v426
        %v440 = vsel %vm437, %v426, %v428
        %v441 = vsel %vm437, %v430, %v432
        %v442 = vsel %vm437, %v432, %v434
        %v443 = vsel %vm437, %v434, %v436
        %452 = vrot.lane.b32.xlu0 %v405, 126
        %v453 = vpop.permute.xlu0 %452
        %454 = vrot.lane.b32.xlu0 %v406, 126
        %v455 = vpop.permute.xlu0 %454
        %456 = vrot.lane.b32.xlu0 %v407, 126
        %v457 = vpop.permute.xlu0 %456
        %458 = vrot.lane.b32.xlu0 %v408, 126
        %v459 = vpop.permute.xlu0 %458
        %460 = vrot.lane.b32.xlu0 %v409, 126
        %v461 = vpop.permute.xlu0 %460
        %462 = vrot.lane.b32.xlu0 %v410, 126
        %v463 = vpop.permute.xlu0 %462
        %464 = vrot.lane.b32.xlu0 %v411, 126
        %v465 = vpop.permute.xlu0 %464
        %466 = vrot.lane.b32.xlu0 %v412, 126
        %v467 = vpop.permute.xlu0 %466
        %vm468 = vcmask 1031168
        %v469 = vsel %vm468, %v453, %v455
        %v470 = vsel %vm468, %v455, %v457
        %v471 = vsel %vm468, %v457, %v459
        %v472 = vsel %vm468, %v461, %v463
        %v473 = vsel %vm468, %v463, %v465
        %v474 = vsel %vm468, %v465, %v467
        %483 = vrot.lane.b32.xlu0 %v405, 110
        %v484 = vpop.permute.xlu0 %483
        %485 = vrot.lane.b32.xlu0 %v406, 110
        %v486 = vpop.permute.xlu0 %485
        %487 = vrot.lane.b32.xlu0 %v407, 110
        %v488 = vpop.permute.xlu0 %487
        %489 = vrot.lane.b32.xlu0 %v408, 110
        %v490 = vpop.permute.xlu0 %489
        %491 = vrot.lane.b32.xlu0 %v409, 110
        %v492 = vpop.permute.xlu0 %491
        %493 = vrot.lane.b32.xlu0 %v410, 110
        %v494 = vpop.permute.xlu0 %493
        %495 = vrot.lane.b32.xlu0 %v411, 110
        %v496 = vpop.permute.xlu0 %495
        %497 = vrot.lane.b32.xlu0 %v412, 110
        %v498 = vpop.permute.xlu0 %497
        %vm499 = vcmask 900096
        %v500 = vsel %vm499, %v484, %v486
        %v501 = vsel %vm499, %v486, %v488
        %v502 = vsel %vm499, %v488, %v490
        %v503 = vsel %vm499, %v492, %v494
        %v504 = vsel %vm499, %v494, %v496
        %v505 = vsel %vm499, %v496, %v498
        %514 = vrot.lane.b32.xlu0 %v405, 109
        %v515 = vpop.permute.xlu0 %514
        %516 = vrot.lane.b32.xlu0 %v406, 109
        %v517 = vpop.permute.xlu0 %516
        %518 = vrot.lane.b32.xlu0 %v407, 109
        %v519 = vpop.permute.xlu0 %518
        %520 = vrot.lane.b32.xlu0 %v408, 109
        %v521 = vpop.permute.xlu0 %520
        %522 = vrot.lane.b32.xlu0 %v409, 109
        %v523 = vpop.permute.xlu0 %522
        %524 = vrot.lane.b32.xlu0 %v410, 109
        %v525 = vpop.permute.xlu0 %524
        %526 = vrot.lane.b32.xlu0 %v411, 109
        %v527 = vpop.permute.xlu0 %526
        %528 = vrot.lane.b32.xlu0 %v412, 109
        %v529 = vpop.permute.xlu0 %528
        %vm530 = vcmask 891904
        %v531 = vsel %vm530, %v515, %v517
        %v532 = vsel %vm530, %v517, %v519
        %v533 = vsel %vm530, %v519, %v521
        %v534 = vsel %vm530, %v523, %v525
        %v535 = vsel %vm530, %v525, %v527
        %v536 = vsel %vm530, %v527, %v529
        %545 = vrot.lane.b32.xlu0 %v405, 108
        %v546 = vpop.permute.xlu0 %545
        %547 = vrot.lane.b32.xlu0 %v406, 108
        %v548 = vpop.permute.xlu0 %547
        %549 = vrot.lane.b32.xlu0 %v407, 108
        %v550 = vpop.permute.xlu0 %549
        %551 = vrot.lane.b32.xlu0 %v408, 108
        %v552 = vpop.permute.xlu0 %551
        %553 = vrot.lane.b32.xlu0 %v409, 108
        %v554 = vpop.permute.xlu0 %553
        %555 = vrot.lane.b32.xlu0 %v410, 108
        %v556 = vpop.permute.xlu0 %555
        %557 = vrot.lane.b32.xlu0 %v411, 108
        %v558 = vpop.permute.xlu0 %557
        %559 = vrot.lane.b32.xlu0 %v412, 108
        %v560 = vpop.permute.xlu0 %559
        %vm561 = vcmask 883712
        %v562 = vsel %vm561, %v546, %v548
        %v563 = vsel %vm561, %v548, %v550
        %v564 = vsel %vm561, %v550, %v552
        %v565 = vsel %vm561, %v554, %v556
        %v566 = vsel %vm561, %v556, %v558
        %v567 = vsel %vm561, %v558, %v560
        %576 = vrot.lane.b32.xlu0 %v405, 92
        %v577 = vpop.permute.xlu0 %576
        %578 = vrot.lane.b32.xlu0 %v406, 92
        %v579 = vpop.permute.xlu0 %578
        %580 = vrot.lane.b32.xlu0 %v407, 92
        %v581 = vpop.permute.xlu0 %580
        %582 = vrot.lane.b32.xlu0 %v408, 92
        %v583 = vpop.permute.xlu0 %582
        %584 = vrot.lane.b32.xlu0 %v409, 92
        %v585 = vpop.permute.xlu0 %584
        %586 = vrot.lane.b32.xlu0 %v410, 92
        %v587 = vpop.permute.xlu0 %586
        %588 = vrot.lane.b32.xlu0 %v411, 92
        %v589 = vpop.permute.xlu0 %588
        %590 = vrot.lane.b32.xlu0 %v412, 92
        %v591 = vpop.permute.xlu0 %590
        %vm592 = vcmask 752640
        %v593 = vsel %vm592, %v577, %v579
        %v594 = vsel %vm592, %v579, %v581
        %v595 = vsel %vm592, %v581, %v583
        %v596 = vsel %vm592, %v585, %v587
        %v597 = vsel %vm592, %v587, %v589
        %v598 = vsel %vm592, %v589, %v591
        %607 = vrot.lane.b32.xlu0 %v405, 91
        %v608 = vpop.permute.xlu0 %607
        %609 = vrot.lane.b32.xlu0 %v406, 91
        %v610 = vpop.permute.xlu0 %609
        %611 = vrot.lane.b32.xlu0 %v407, 91
        %v612 = vpop.permute.xlu0 %611
        %613 = vrot.lane.b32.xlu0 %v408, 91
        %v614 = vpop.permute.xlu0 %613
        %615 = vrot.lane.b32.xlu0 %v409, 91
        %v616 = vpop.permute.xlu0 %615
        %617 = vrot.lane.b32.xlu0 %v410, 91
        %v618 = vpop.permute.xlu0 %617
        %619 = vrot.lane.b32.xlu0 %v411, 91
        %v620 = vpop.permute.xlu0 %619
        %621 = vrot.lane.b32.xlu0 %v412, 91
        %v622 = vpop.permute.xlu0 %621
        %vm623 = vcmask 744448
        %v624 = vsel %vm623, %v608, %v610
        %v625 = vsel %vm623, %v610, %v612
        %v626 = vsel %vm623, %v612, %v614
        %v627 = vsel %vm623, %v616, %v618
        %v628 = vsel %vm623, %v618, %v620
        %v629 = vsel %vm623, %v620, %v622
        %638 = vrot.lane.b32.xlu0 %v405, 90
        %v639 = vpop.permute.xlu0 %638
        %640 = vrot.lane.b32.xlu0 %v406, 90
        %v641 = vpop.permute.xlu0 %640
        %642 = vrot.lane.b32.xlu0 %v407, 90
        %v643 = vpop.permute.xlu0 %642
        %644 = vrot.lane.b32.xlu0 %v408, 90
        %v645 = vpop.permute.xlu0 %644
        %646 = vrot.lane.b32.xlu0 %v409, 90
        %v647 = vpop.permute.xlu0 %646
        %648 = vrot.lane.b32.xlu0 %v410, 90
        %v649 = vpop.permute.xlu0 %648
        %650 = vrot.lane.b32.xlu0 %v411, 90
        %v651 = vpop.permute.xlu0 %650
        %652 = vrot.lane.b32.xlu0 %v412, 90
        %v653 = vpop.permute.xlu0 %652
        %vm654 = vcmask 736256
        %v655 = vsel %vm654, %v639, %v641
        %v656 = vsel %vm654, %v641, %v643
        %v657 = vsel %vm654, %v643, %v645
        %v658 = vsel %vm654, %v647, %v649
        %v659 = vsel %vm654, %v649, %v651
        %v660 = vsel %vm654, %v651, %v653
        %v669 = vld [vmem:[%s1] sm:$0xff]
        %v670 = vld [vmem:[%s1 + $0x8] sm:$0xff]
        %v671 = vld [vmem:[%s1 + $0x10] sm:$0xff]
        %v672 = vld [vmem:[%s1 + $0x18] sm:$0xff]
        %v673 = vld [vmem:[%s2] sm:$0xff]
        %v674 = vld [vmem:[%s2 + $0x8] sm:$0xff]
        %676 = vset.pattern.permute.xlu0 0
        %677 = vperm.xlu0 %676, %v673
        %v678 = vpop.permute.xlu0 %677
        %681 = vset.pattern.permute.xlu0 0
        %682 = vperm.xlu0 %681, %v674
        %v683 = vpop.permute.xlu0 %682
        %vm685 = vcmask 130048
        %v687 = vsel %vm685, %v670, 0
        %v690 = vsel %vm685, %v672, 0
        %692 = vmatprep.subr.mxu0 %v406
        %693 = vmatpush1.msra.mxu0 %v405
        %694 = vmatprep.subr.mxu0 %v410
        %695 = vmatpush1.msra.mxu0 %v409
        %696 = vmatprep.subr.mxu0 %v439
        %697 = vmatpush1.msra.mxu0 %v438
        %698 = vmatprep.subr.mxu0 %v442
        %699 = vmatpush1.msra.mxu0 %v441
        %700 = vmatprep.subr.mxu0 %v470
        %701 = vmatpush1.msra.mxu0 %v469
        %702 = vmatprep.subr.mxu0 %v473
        %703 = vmatpush1.msra.mxu0 %v472
        %704 = vmatprep.subr.mxu0 %v501
        %705 = vmatpush1.msra.mxu0 %v500
        %706 = vmatprep.subr.mxu0 %v504
        %707 = vmatpush1.msra.mxu0 %v503
        %708 = vmatprep.subr.mxu0 %v532
        %709 = vmatpush1.msra.mxu0 %v531
        %710 = vmatprep.subr.mxu0 %v535
        %711 = vmatpush1.msra.mxu0 %v534
        %712 = vmatprep.subr.mxu0 %v563
        %713 = vmatpush1.msra.mxu0 %v562
        %714 = vmatprep.subr.mxu0 %v566
        %715 = vmatpush1.msra.mxu0 %v565
        %716 = vmatprep.subr.mxu0 %v594
        %717 = vmatpush1.msra.mxu0 %v593
        %718 = vmatprep.subr.mxu0 %v597
        %719 = vmatpush1.msra.mxu0 %v596
        %720 = vmatprep.subr.mxu0 %v625
        %721 = vmatpush1.msra.mxu0 %v624
        %722 = vmatprep.subr.mxu0 %v628
        %723 = vmatpush1.msra.mxu0 %v627
        %724 = vmatprep.subr.mxu0 %v656
        %725 = vmatpush1.msra.mxu0 %v655
        %726 = vmatprep.subr.mxu0 %v659
        %727 = vmatpush1.msra.mxu0 %v658
        %728 = vmatprep.subr.mxu0 0.0
        %729 = vmatpush1.msra.mxu0 0.0
        %730 = vmatprep.subr.mxu0 0.0
        %731 = vmatpush1.msra.mxu0 0.0
        %732 = vmatprep.subr.mxu0 0.0
        %733 = vmatpush1.msra.mxu0 0.0
        %734 = vmatprep.subr.mxu0 0.0
        %735 = vmatpush1.msra.mxu0 0.0
        %736 = vmatprep.subr.mxu0 0.0
        %737 = vmatpush1.msra.mxu0 0.0
        %738 = vmatprep.subr.mxu0 0.0
        %739 = vmatpush1.msra.mxu0 0.0
        %740 = vmatprep.subr.mxu0 0.0
        %741 = vmatpush1.msra.mxu0 0.0
        %742 = vmatprep.subr.mxu0 0.0
        %743 = vmatpush1.msra.mxu0 0.0
        %744 = vmatprep.subr.mxu0 0.0
        %745 = vmatpush1.msra.mxu0 0.0
        %746 = vmatprep.subr.mxu0 0.0
        %747 = vmatpush1.msra.mxu0 0.0
        %748 = vmatprep.subr.mxu0 0.0
        %749 = vmatpush1.msra.mxu0 0.0
        %750 = vmatprep.subr.mxu0 0.0
        %751 = vmatpush1.msra.mxu0 0.0
        %752 = vmatprep.subr.mxu0 0.0
        %753 = vmatpush1.msra.mxu0 0.0
        %754 = vmatprep.subr.mxu0 0.0
        %755 = vmatpush1.msra.mxu0 0.0
        %756 = vmatprep.mubr.f32.mxu0 %v687
        %757 = vmatmul.mubr.f32.gmra.mrb[0].mxu0 %v669
        %v758 = vpop.f32.mrb[0].mxu0
        %v759 = vadd.f32 %v678, %v758
        %v760 = vpop.f32.mrb[0].mxu0
        %v761 = vadd.f32 %v678, %v760
        %762 = vmatprep.mubr.f32.mxu0 %v690
        %763 = vmatmul.mubr.f32.gmra.mrb[0].mxu0 %v671
        %v764 = vpop.f32.mrb[0].mxu0
        %v765 = vadd.f32 %v683, %v764
        %v766 = vpop.f32.mrb[0].mxu0
        %v767 = vadd.f32 %v683, %v766
        %768 = vdwg.mxu0
        %769 = vmatprep.subr.mxu0 %v408
        %770 = vmatpush1.msra.mxu0 %v407
        %771 = vmatprep.subr.mxu0 %v412
        %772 = vmatpush1.msra.mxu0 %v411
        %773 = vmatprep.subr.mxu0 %v428
        %774 = vmatpush1.msra.mxu0 %v440
        %775 = vmatprep.subr.mxu0 %v436
        %776 = vmatpush1.msra.mxu0 %v443
        %777 = vmatprep.subr.mxu0 %v459
        %778 = vmatpush1.msra.mxu0 %v471
        %779 = vmatprep.subr.mxu0 %v467
        %780 = vmatpush1.msra.mxu0 %v474
        %781 = vmatprep.subr.mxu0 %v490
        %782 = vmatpush1.msra.mxu0 %v502
        %783 = vmatprep.subr.mxu0 %v498
        %784 = vmatpush1.msra.mxu0 %v505
        %785 = vmatprep.subr.mxu0 %v521
        %786 = vmatpush1.msra.mxu0 %v533
        %787 = vmatprep.subr.mxu0 %v529
        %788 = vmatpush1.msra.mxu0 %v536
        %789 = vmatprep.subr.mxu0 %v552
        %790 = vmatpush1.msra.mxu0 %v564
        %791 = vmatprep.subr.mxu0 %v560
        %792 = vmatpush1.msra.mxu0 %v567
        %793 = vmatprep.subr.mxu0 %v583
        %794 = vmatpush1.msra.mxu0 %v595
        %795 = vmatprep.subr.mxu0 %v591
        %796 = vmatpush1.msra.mxu0 %v598
        %797 = vmatprep.subr.mxu0 %v614
        %798 = vmatpush1.msra.mxu0 %v626
        %799 = vmatprep.subr.mxu0 %v622
        %800 = vmatpush1.msra.mxu0 %v629
        %801 = vmatprep.subr.mxu0 %v645
        %802 = vmatpush1.msra.mxu0 %v657
        %803 = vmatprep.subr.mxu0 %v653
        %804 = vmatpush1.msra.mxu0 %v660
        %805 = vmatprep.subr.mxu0 0.0
        %806 = vmatpush1.msra.mxu0 0.0
        %807 = vmatprep.subr.mxu0 0.0
        %808 = vmatpush1.msra.mxu0 0.0
        %809 = vmatprep.subr.mxu0 0.0
        %810 = vmatpush1.msra.mxu0 0.0
        %811 = vmatprep.subr.mxu0 0.0
        %812 = vmatpush1.msra.mxu0 0.0
        %813 = vmatprep.subr.mxu0 0.0
        %814 = vmatpush1.msra.mxu0 0.0
        %815 = vmatprep.subr.mxu0 0.0
        %816 = vmatpush1.msra.mxu0 0.0
        %817 = vmatprep.subr.mxu0 0.0
        %818 = vmatpush1.msra.mxu0 0.0
        %819 = vmatprep.subr.mxu0 0.0
        %820 = vmatpush1.msra.mxu0 0.0
        %821 = vmatprep.subr.mxu0 0.0
        %822 = vmatpush1.msra.mxu0 0.0
        %823 = vmatprep.subr.mxu0 0.0
        %824 = vmatpush1.msra.mxu0 0.0
        %825 = vmatprep.subr.mxu0 0.0
        %826 = vmatpush1.msra.mxu0 0.0
        %827 = vmatprep.subr.mxu0 0.0
        %828 = vmatpush1.msra.mxu0 0.0
        %829 = vmatprep.subr.mxu0 0.0
        %830 = vmatpush1.msra.mxu0 0.0
        %831 = vmatprep.subr.mxu0 0.0
        %832 = vmatpush1.msra.mxu0 0.0
        %833 = vmatprep.mubr.f32.mxu0 %v687
        %834 = vmatmul.mubr.f32.gmra.mrb[0].mxu0 %v669
        %v835 = vpop.f32.mrb[0].mxu0
        %v836 = vadd.f32 %v678, %v835
        %v837 = vpop.f32.mrb[0].mxu0
        %v838 = vadd.f32 %v678, %v837
        %839 = vmatprep.mubr.f32.mxu0 %v690
        %840 = vmatmul.mubr.f32.gmra.mrb[0].mxu0 %v671
        %v841 = vpop.f32.mrb[0].mxu0
        %v842 = vadd.f32 %v683, %v841
        %v843 = vpop.f32.mrb[0].mxu0
        %v844 = vadd.f32 %v683, %v843
        %845 = vdwg.mxu0
        %v846 = vmax.f32 %v759, 0.0
        %v847 = vmax.f32 %v761, 0.0
        %v848 = vmax.f32 %v836, 0.0
        %v849 = vmax.f32 %v838, 0.0
        %v850 = vmax.f32 %v765, 0.0
        %v851 = vmax.f32 %v767, 0.0
        %v852 = vmax.f32 %v842, 0.0
        %v853 = vmax.f32 %v844, 0.0
        %v854 = vld [vmem:[%s9] sm:$0xf]
        %v856 = vlaneseq
        %v857 = vshrl.u32 %v856, 7
        %v858 = vsub.s32 0, %v857
        %v859 = vrot.slane %v854, %v858
        %v860 = vlaneseq
        %v861 = vshrl.u32 %v860, 7
        %v862 = vsub.s32 1, %v861
        %v863 = vrot.slane %v854, %v862
        %v864 = vlaneseq
        %v865 = vshrl.u32 %v864, 7
        %v866 = vsub.s32 2, %v865
        %v867 = vrot.slane %v854, %v866
        %v868 = vlaneseq
        %v869 = vshrl.u32 %v868, 7
        %v870 = vsub.s32 3, %v869
        %v871 = vrot.slane %v854, %v870
        %v876 = vmul.f32 %v846, %v859
        %v877 = vmul.f32 %v847, %v863
        %v878 = vmul.f32 %v848, %v867
        %v879 = vmul.f32 %v849, %v871
        %v880 = vmul.f32 %v850, %v859
        %v881 = vmul.f32 %v851, %v863
        %v882 = vmul.f32 %v852, %v867
        %v883 = vmul.f32 %v853, %v871
        %892 = vrot.lane.b32.xlu0 %v876, 127
        %v893 = vpop.permute.xlu0 %892
        %894 = vrot.lane.b32.xlu0 %v877, 127
        %v895 = vpop.permute.xlu0 %894
        %896 = vrot.lane.b32.xlu0 %v878, 127
        %v897 = vpop.permute.xlu0 %896
        %898 = vrot.lane.b32.xlu0 %v879, 127
        %v899 = vpop.permute.xlu0 %898
        %900 = vrot.lane.b32.xlu0 %v880, 127
        %v901 = vpop.permute.xlu0 %900
        %902 = vrot.lane.b32.xlu0 %v881, 127
        %v903 = vpop.permute.xlu0 %902
        %904 = vrot.lane.b32.xlu0 %v882, 127
        %v905 = vpop.permute.xlu0 %904
        %906 = vrot.lane.b32.xlu0 %v883, 127
        %v907 = vpop.permute.xlu0 %906
        %v908 = vsel %vm437, %v893, %v895
        %v909 = vsel %vm437, %v895, %v897
        %v910 = vsel %vm437, %v897, %v899
        %v911 = vsel %vm437, %v901, %v903
        %v912 = vsel %vm437, %v903, %v905
        %v913 = vsel %vm437, %v905, %v907
        %920 = vrot.lane.b32.xlu0 %v876, 126
        %v921 = vpop.permute.xlu0 %920
        %922 = vrot.lane.b32.xlu0 %v877, 126
        %v923 = vpop.permute.xlu0 %922
        %924 = vrot.lane.b32.xlu0 %v878, 126
        %v925 = vpop.permute.xlu0 %924
        %926 = vrot.lane.b32.xlu0 %v879, 126
        %v927 = vpop.permute.xlu0 %926
        %928 = vrot.lane.b32.xlu0 %v880, 126
        %v929 = vpop.permute.xlu0 %928
        %930 = vrot.lane.b32.xlu0 %v881, 126
        %v931 = vpop.permute.xlu0 %930
        %932 = vrot.lane.b32.xlu0 %v882, 126
        %v933 = vpop.permute.xlu0 %932
        %934 = vrot.lane.b32.xlu0 %v883, 126
        %v935 = vpop.permute.xlu0 %934
        %v936 = vsel %vm468, %v921, %v923
        %v937 = vsel %vm468, %v923, %v925
        %v938 = vsel %vm468, %v925, %v927
        %v939 = vsel %vm468, %v929, %v931
        %v940 = vsel %vm468, %v931, %v933
        %v941 = vsel %vm468, %v933, %v935
        %948 = vrot.lane.b32.xlu0 %v876, 110
        %v949 = vpop.permute.xlu0 %948
        %950 = vrot.lane.b32.xlu0 %v877, 110
        %v951 = vpop.permute.xlu0 %950
        %952 = vrot.lane.b32.xlu0 %v878, 110
        %v953 = vpop.permute.xlu0 %952
        %954 = vrot.lane.b32.xlu0 %v879, 110
        %v955 = vpop.permute.xlu0 %954
        %956 = vrot.lane.b32.xlu0 %v880, 110
        %v957 = vpop.permute.xlu0 %956
        %958 = vrot.lane.b32.xlu0 %v881, 110
        %v959 = vpop.permute.xlu0 %958
        %960 = vrot.lane.b32.xlu0 %v882, 110
        %v961 = vpop.permute.xlu0 %960
        %962 = vrot.lane.b32.xlu0 %v883, 110
        %v963 = vpop.permute.xlu0 %962
        %v964 = vsel %vm499, %v949, %v951
        %v965 = vsel %vm499, %v951, %v953
        %v966 = vsel %vm499, %v953, %v955
        %v967 = vsel %vm499, %v957, %v959
        %v968 = vsel %vm499, %v959, %v961
        %v969 = vsel %vm499, %v961, %v963
        %976 = vrot.lane.b32.xlu0 %v876, 109
        %v977 = vpop.permute.xlu0 %976
        %978 = vrot.lane.b32.xlu0 %v877, 109
        %v979 = vpop.permute.xlu0 %978
        %980 = vrot.lane.b32.xlu0 %v878, 109
        %v981 = vpop.permute.xlu0 %980
        %982 = vrot.lane.b32.xlu0 %v879, 109
        %v983 = vpop.permute.xlu0 %982
        %984 = vrot.lane.b32.xlu0 %v880, 109
        %v985 = vpop.permute.xlu0 %984
        %986 = vrot.lane.b32.xlu0 %v881, 109
        %v987 = vpop.permute.xlu0 %986
        %988 = vrot.lane.b32.xlu0 %v882, 109
        %v989 = vpop.permute.xlu0 %988
        %990 = vrot.lane.b32.xlu0 %v883, 109
        %v991 = vpop.permute.xlu0 %990
        %v992 = vsel %vm530, %v977, %v979
        %v993 = vsel %vm530, %v979, %v981
        %v994 = vsel %vm530, %v981, %v983
        %v995 = vsel %vm530, %v985, %v987
        %v996 = vsel %vm530, %v987, %v989
        %v997 = vsel %vm530, %v989, %v991
        %1004 = vrot.lane.b32.xlu0 %v876, 108
        %v1005 = vpop.permute.xlu0 %1004
        %1006 = vrot.lane.b32.xlu0 %v877, 108
        %v1007 = vpop.permute.xlu0 %1006
        %1008 = vrot.lane.b32.xlu0 %v878, 108
        %v1009 = vpop.permute.xlu0 %1008
        %1010 = vrot.lane.b32.xlu0 %v879, 108
        %v1011 = vpop.permute.xlu0 %1010
        %1012 = vrot.lane.b32.xlu0 %v880, 108
        %v1013 = vpop.permute.xlu0 %1012
        %1014 = vrot.lane.b32.xlu0 %v881, 108
        %v1015 = vpop.permute.xlu0 %1014
        %1016 = vrot.lane.b32.xlu0 %v882, 108
        %v1017 = vpop.permute.xlu0 %1016
        %1018 = vrot.lane.b32.xlu0 %v883, 108
        %v1019 = vpop.permute.xlu0 %1018
        %v1020 = vsel %vm561, %v1005, %v1007
        %v1021 = vsel %vm561, %v1007, %v1009
        %v1022 = vsel %vm561, %v1009, %v1011
        %v1023 = vsel %vm561, %v1013, %v1015
        %v1024 = vsel %vm561, %v1015, %v1017
        %v1025 = vsel %vm561, %v1017, %v1019
        %1032 = vrot.lane.b32.xlu0 %v876, 92
        %v1033 = vpop.permute.xlu0 %1032
        %1034 = vrot.lane.b32.xlu0 %v877, 92
        %v1035 = vpop.permute.xlu0 %1034
        %1036 = vrot.lane.b32.xlu0 %v878, 92
        %v1037 = vpop.permute.xlu0 %1036
        %1038 = vrot.lane.b32.xlu0 %v879, 92
        %v1039 = vpop.permute.xlu0 %1038
        %1040 = vrot.lane.b32.xlu0 %v880, 92
        %v1041 = vpop.permute.xlu0 %1040
        %1042 = vrot.lane.b32.xlu0 %v881, 92
        %v1043 = vpop.permute.xlu0 %1042
        %1044 = vrot.lane.b32.xlu0 %v882, 92
        %v1045 = vpop.permute.xlu0 %1044
        %1046 = vrot.lane.b32.xlu0 %v883, 92
        %v1047 = vpop.permute.xlu0 %1046
        %v1048 = vsel %vm592, %v1033, %v1035
        %v1049 = vsel %vm592, %v1035, %v1037
        %v1050 = vsel %vm592, %v1037, %v1039
        %v1051 = vsel %vm592, %v1041, %v1043
        %v1052 = vsel %vm592, %v1043, %v1045
        %v1053 = vsel %vm592, %v1045, %v1047
        %1060 = vrot.lane.b32.xlu0 %v876, 91
        %v1061 = vpop.permute.xlu0 %1060
        %1062 = vrot.lane.b32.xlu0 %v877, 91
        %v1063 = vpop.permute.xlu0 %1062
        %1064 = vrot.lane.b32.xlu0 %v878, 91
        %v1065 = vpop.permute.xlu0 %1064
        %1066 = vrot.lane.b32.xlu0 %v879, 91
        %v1067 = vpop.permute.xlu0 %1066
        %1068 = vrot.lane.b32.xlu0 %v880, 91
        %v1069 = vpop.permute.xlu0 %1068
        %1070 = vrot.lane.b32.xlu0 %v881, 91
        %v1071 = vpop.permute.xlu0 %1070
        %1072 = vrot.lane.b32.xlu0 %v882, 91
        %v1073 = vpop.permute.xlu0 %1072
        %1074 = vrot.lane.b32.xlu0 %v883, 91
        %v1075 = vpop.permute.xlu0 %1074
        %v1076 = vsel %vm623, %v1061, %v1063
        %v1077 = vsel %vm623, %v1063, %v1065
        %v1078 = vsel %vm623, %v1065, %v1067
        %v1079 = vsel %vm623, %v1069, %v1071
        %v1080 = vsel %vm623, %v1071, %v1073
        %v1081 = vsel %vm623, %v1073, %v1075
        %1088 = vrot.lane.b32.xlu0 %v876, 90
        %v1089 = vpop.permute.xlu0 %1088
        %1090 = vrot.lane.b32.xlu0 %v877, 90
        %v1091 = vpop.permute.xlu0 %1090
        %1092 = vrot.lane.b32.xlu0 %v878, 90
        %v1093 = vpop.permute.xlu0 %1092
        %1094 = vrot.lane.b32.xlu0 %v879, 90
        %v1095 = vpop.permute.xlu0 %1094
        %1096 = vrot.lane.b32.xlu0 %v880, 90
        %v1097 = vpop.permute.xlu0 %1096
        %1098 = vrot.lane.b32.xlu0 %v881, 90
        %v1099 = vpop.permute.xlu0 %1098
        %1100 = vrot.lane.b32.xlu0 %v882, 90
        %v1101 = vpop.permute.xlu0 %1100
        %1102 = vrot.lane.b32.xlu0 %v883, 90
        %v1103 = vpop.permute.xlu0 %1102
        %v1104 = vsel %vm654, %v1089, %v1091
        %v1105 = vsel %vm654, %v1091, %v1093
        %v1106 = vsel %vm654, %v1093, %v1095
        %v1107 = vsel %vm654, %v1097, %v1099
        %v1108 = vsel %vm654, %v1099, %v1101
        %v1109 = vsel %vm654, %v1101, %v1103
        %v1116 = vld [vmem:[%s3] sm:$0xff]
        %v1117 = vld [vmem:[%s3 + $0x8] sm:$0xff]
        %v1118 = vld [vmem:[%s3 + $0x10] sm:$0xff]
        %v1119 = vld [vmem:[%s3 + $0x18] sm:$0xff]
        %v1120 = vld [vmem:[%s4] sm:$0xff]
        %v1121 = vld [vmem:[%s4 + $0x8] sm:$0xff]
        %1123 = vset.pattern.permute.xlu0 0
        %1124 = vperm.xlu0 %1123, %v1120
        %v1125 = vpop.permute.xlu0 %1124
        %1128 = vset.pattern.permute.xlu0 0
        %1129 = vperm.xlu0 %1128, %v1121
        %v1130 = vpop.permute.xlu0 %1129
        %v1133 = vsel %vm685, %v1117, 0
        %v1136 = vsel %vm685, %v1119, 0
        %1138 = vmatprep.subr.mxu0 %v877
        %1139 = vmatpush1.msra.mxu0 %v876
        %1140 = vmatprep.subr.mxu0 %v881
        %1141 = vmatpush1.msra.mxu0 %v880
        %1142 = vmatprep.subr.mxu0 %v909
        %1143 = vmatpush1.msra.mxu0 %v908
        %1144 = vmatprep.subr.mxu0 %v912
        %1145 = vmatpush1.msra.mxu0 %v911
        %1146 = vmatprep.subr.mxu0 %v937
        %1147 = vmatpush1.msra.mxu0 %v936
        %1148 = vmatprep.subr.mxu0 %v940
        %1149 = vmatpush1.msra.mxu0 %v939
        %1150 = vmatprep.subr.mxu0 %v965
        %1151 = vmatpush1.msra.mxu0 %v964
        %1152 = vmatprep.subr.mxu0 %v968
        %1153 = vmatpush1.msra.mxu0 %v967
        %1154 = vmatprep.subr.mxu0 %v993
        %1155 = vmatpush1.msra.mxu0 %v992
        %1156 = vmatprep.subr.mxu0 %v996
        %1157 = vmatpush1.msra.mxu0 %v995
        %1158 = vmatprep.subr.mxu0 %v1021
        %1159 = vmatpush1.msra.mxu0 %v1020
        %1160 = vmatprep.subr.mxu0 %v1024
        %1161 = vmatpush1.msra.mxu0 %v1023
        %1162 = vmatprep.subr.mxu0 %v1049
        %1163 = vmatpush1.msra.mxu0 %v1048
        %1164 = vmatprep.subr.mxu0 %v1052
        %1165 = vmatpush1.msra.mxu0 %v1051
        %1166 = vmatprep.subr.mxu0 %v1077
        %1167 = vmatpush1.msra.mxu0 %v1076
        %1168 = vmatprep.subr.mxu0 %v1080
        %1169 = vmatpush1.msra.mxu0 %v1079
        %1170 = vmatprep.subr.mxu0 %v1105
        %1171 = vmatpush1.msra.mxu0 %v1104
        %1172 = vmatprep.subr.mxu0 %v1108
        %1173 = vmatpush1.msra.mxu0 %v1107
        %1174 = vmatprep.subr.mxu0 0.0
        %1175 = vmatpush1.msra.mxu0 0.0
        %1176 = vmatprep.subr.mxu0 0.0
        %1177 = vmatpush1.msra.mxu0 0.0
        %1178 = vmatprep.subr.mxu0 0.0
        %1179 = vmatpush1.msra.mxu0 0.0
        %1180 = vmatprep.subr.mxu0 0.0
        %1181 = vmatpush1.msra.mxu0 0.0
        %1182 = vmatprep.subr.mxu0 0.0
        %1183 = vmatpush1.msra.mxu0 0.0
        %1184 = vmatprep.subr.mxu0 0.0
        %1185 = vmatpush1.msra.mxu0 0.0
        %1186 = vmatprep.subr.mxu0 0.0
        %1187 = vmatpush1.msra.mxu0 0.0
        %1188 = vmatprep.subr.mxu0 0.0
        %1189 = vmatpush1.msra.mxu0 0.0
        %1190 = vmatprep.subr.mxu0 0.0
        %1191 = vmatpush1.msra.mxu0 0.0
        %1192 = vmatprep.subr.mxu0 0.0
        %1193 = vmatpush1.msra.mxu0 0.0
        %1194 = vmatprep.subr.mxu0 0.0
        %1195 = vmatpush1.msra.mxu0 0.0
        %1196 = vmatprep.subr.mxu0 0.0
        %1197 = vmatpush1.msra.mxu0 0.0
        %1198 = vmatprep.subr.mxu0 0.0
        %1199 = vmatpush1.msra.mxu0 0.0
        %1200 = vmatprep.subr.mxu0 0.0
        %1201 = vmatpush1.msra.mxu0 0.0
        %1202 = vmatprep.mubr.f32.mxu0 %v1133
        %1203 = vmatmul.mubr.f32.gmra.mrb[0].mxu0 %v1116
        %v1204 = vpop.f32.mrb[0].mxu0
        %v1205 = vadd.f32 %v1125, %v1204
        %v1206 = vpop.f32.mrb[0].mxu0
        %v1207 = vadd.f32 %v1125, %v1206
        %1208 = vmatprep.mubr.f32.mxu0 %v1136
        %1209 = vmatmul.mubr.f32.gmra.mrb[0].mxu0 %v1118
        %v1210 = vpop.f32.mrb[0].mxu0
        %v1211 = vadd.f32 %v1130, %v1210
        %v1212 = vpop.f32.mrb[0].mxu0
        %v1213 = vadd.f32 %v1130, %v1212
        %1214 = vdwg.mxu0
        %1215 = vmatprep.subr.mxu0 0.0
        %1216 = vmatpush1.msra.mxu0 %v878
        %1217 = vmatprep.subr.mxu0 0.0
        %1218 = vmatpush1.msra.mxu0 %v882
        %1219 = vmatprep.subr.mxu0 0.0
        %1220 = vmatpush1.msra.mxu0 %v910
        %1221 = vmatprep.subr.mxu0 0.0
        %1222 = vmatpush1.msra.mxu0 %v913
        %1223 = vmatprep.subr.mxu0 0.0
        %1224 = vmatpush1.msra.mxu0 %v938
        %1225 = vmatprep.subr.mxu0 0.0
        %1226 = vmatpush1.msra.mxu0 %v941
        %1227 = vmatprep.subr.mxu0 0.0
        %1228 = vmatpush1.msra.mxu0 %v966
        %1229 = vmatprep.subr.mxu0 0.0
        %1230 = vmatpush1.msra.mxu0 %v969
        %1231 = vmatprep.subr.mxu0 0.0
        %1232 = vmatpush1.msra.mxu0 %v994
        %1233 = vmatprep.subr.mxu0 0.0
        %1234 = vmatpush1.msra.mxu0 %v997
        %1235 = vmatprep.subr.mxu0 0.0
        %1236 = vmatpush1.msra.mxu0 %v1022
        %1237 = vmatprep.subr.mxu0 0.0
        %1238 = vmatpush1.msra.mxu0 %v1025
        %1239 = vmatprep.subr.mxu0 0.0
        %1240 = vmatpush1.msra.mxu0 %v1050
        %1241 = vmatprep.subr.mxu0 0.0
        %1242 = vmatpush1.msra.mxu0 %v1053
        %1243 = vmatprep.subr.mxu0 0.0
        %1244 = vmatpush1.msra.mxu0 %v1078
        %1245 = vmatprep.subr.mxu0 0.0
        %1246 = vmatpush1.msra.mxu0 %v1081
        %1247 = vmatprep.subr.mxu0 0.0
        %1248 = vmatpush1.msra.mxu0 %v1106
        %1249 = vmatprep.subr.mxu0 0.0
        %1250 = vmatpush1.msra.mxu0 %v1109
        %1251 = vmatprep.subr.mxu0 0.0
        %1252 = vmatpush1.msra.mxu0 0.0
        %1253 = vmatprep.subr.mxu0 0.0
        %1254 = vmatpush1.msra.mxu0 0.0
        %1255 = vmatprep.subr.mxu0 0.0
        %1256 = vmatpush1.msra.mxu0 0.0
        %1257 = vmatprep.subr.mxu0 0.0
        %1258 = vmatpush1.msra.mxu0 0.0
        %1259 = vmatprep.subr.mxu0 0.0
        %1260 = vmatpush1.msra.mxu0 0.0
        %1261 = vmatprep.subr.mxu0 0.0
        %1262 = vmatpush1.msra.mxu0 0.0
        %1263 = vmatprep.subr.mxu0 0.0
        %1264 = vmatpush1.msra.mxu0 0.0
        %1265 = vmatprep.subr.mxu0 0.0
        %1266 = vmatpush1.msra.mxu0 0.0
        %1267 = vmatprep.subr.mxu0 0.0
        %1268 = vmatpush1.msra.mxu0 0.0
        %1269 = vmatprep.subr.mxu0 0.0
        %1270 = vmatpush1.msra.mxu0 0.0
        %1271 = vmatprep.subr.mxu0 0.0
        %1272 = vmatpush1.msra.mxu0 0.0
        %1273 = vmatprep.subr.mxu0 0.0
        %1274 = vmatpush1.msra.mxu0 0.0
        %1275 = vmatprep.subr.mxu0 0.0
        %1276 = vmatpush1.msra.mxu0 0.0
        %1277 = vmatprep.subr.mxu0 0.0
        %1278 = vmatpush1.msra.mxu0 0.0
        %1279 = vmatprep.mubr.f32.mxu0 %v1133
        %1280 = vmatmul.mubr.f32.gmra.mrb[0].mxu0 %v1116
        %v1281 = vpop.f32.mrb[0].mxu0
        %v1282 = vadd.f32 %v1125, %v1281
        %v1283 = vpop.f32.mrb[0].mxu0
        %1284 = vmatprep.mubr.f32.mxu0 %v1136
        %1285 = vmatmul.mubr.f32.gmra.mrb[0].mxu0 %v1118
        %v1286 = vpop.f32.mrb[0].mxu0
        %v1287 = vadd.f32 %v1130, %v1286
        %v1288 = vpop.f32.mrb[0].mxu0
        %1289 = vdwg.mxu0
        %v1290 = vld [vmem:[%s10] sm:$0x7]
        %v1292 = vlaneseq
        %v1293 = vshrl.u32 %v1292, 7
        %v1294 = vsub.s32 0, %v1293
        %v1295 = vrot.slane %v1290, %v1294
        %v1296 = vlaneseq
        %v1297 = vshrl.u32 %v1296, 7
        %v1298 = vsub.s32 1, %v1297
        %v1299 = vrot.slane %v1290, %v1298
        %v1300 = vlaneseq
        %v1301 = vshrl.u32 %v1300, 7
        %v1302 = vsub.s32 2, %v1301
        %v1303 = vrot.slane %v1290, %v1302
        %v1307 = vmul.f32 %v1205, %v1295
        %v1308 = vmul.f32 %v1207, %v1299
        %v1309 = vmul.f32 %v1282, %v1303
        %v1310 = vmul.f32 %v1211, %v1295
        %v1311 = vmul.f32 %v1213, %v1299
        %v1312 = vmul.f32 %v1287, %v1303
        %v1313 = vadd.f32 %v1307, %v1308
        %v1314 = vadd.f32 %v1313, %v1309
        %1315 = vadd.xlane.f32.xlu0 %v1314
        %v1316 = vpop.xlane.xlu0 %1315
        %v1317 = vadd.f32 %v1310, %v1311
        %v1318 = vadd.f32 %v1317, %v1312
        %1319 = vadd.xlane.f32.xlu0 %v1318
        %v1320 = vpop.xlane.xlu0 %1319
        %v1321 = vmul.f32 %v1316, 0.00390625
        %v1322 = vmul.f32 %v1320, 0.00390625
        %v1323 = vld [vmem:[%s5] sm:$0xf]
        %v1324 = vld [vmem:[%s6] sm:$0xf]
        %v1326 = vsel %vm685, %v1323, 0
        %1328 = vmatprep.subr.mxu0 0.0
        %1329 = vmatpush1.msra.mxu0 %v1321
        %1330 = vmatprep.subr.mxu0 0.0
        %1331 = vmatpush1.msra.mxu0 %v1322
        %1332 = vmatprep.subr.mxu0 0.0
        %1333 = vmatpush1.msra.mxu0 0.0
        %1334 = vmatprep.subr.mxu0 0.0
        %1335 = vmatpush1.msra.mxu0 0.0
        %1336 = vmatprep.subr.mxu0 0.0
        %1337 = vmatpush1.msra.mxu0 0.0
        %1338 = vmatprep.subr.mxu0 0.0
        %1339 = vmatpush1.msra.mxu0 0.0
        %1340 = vmatprep.subr.mxu0 0.0
        %1341 = vmatpush1.msra.mxu0 0.0
        %1342 = vmatprep.subr.mxu0 0.0
        %1343 = vmatpush1.msra.mxu0 0.0
        %1344 = vmatprep.subr.mxu0 0.0
        %1345 = vmatpush1.msra.mxu0 0.0
        %1346 = vmatprep.subr.mxu0 0.0
        %1347 = vmatpush1.msra.mxu0 0.0
        %1348 = vmatprep.subr.mxu0 0.0
        %1349 = vmatpush1.msra.mxu0 0.0
        %1350 = vmatprep.subr.mxu0 0.0
        %1351 = vmatpush1.msra.mxu0 0.0
        %1352 = vmatprep.subr.mxu0 0.0
        %1353 = vmatpush1.msra.mxu0 0.0
        %1354 = vmatprep.subr.mxu0 0.0
        %1355 = vmatpush1.msra.mxu0 0.0
        %1356 = vmatprep.subr.mxu0 0.0
        %1357 = vmatpush1.msra.mxu0 0.0
        %1358 = vmatprep.subr.mxu0 0.0
        %1359 = vmatpush1.msra.mxu0 0.0
        %1360 = vmatprep.subr.mxu0 0.0
        %1361 = vmatpush1.msra.mxu0 0.0
        %1362 = vmatprep.subr.mxu0 0.0
        %1363 = vmatpush1.msra.mxu0 0.0
        %1364 = vmatprep.subr.mxu0 0.0
        %1365 = vmatpush1.msra.mxu0 0.0
        %1366 = vmatprep.subr.mxu0 0.0
        %1367 = vmatpush1.msra.mxu0 0.0
        %1368 = vmatprep.subr.mxu0 0.0
        %1369 = vmatpush1.msra.mxu0 0.0
        %1370 = vmatprep.subr.mxu0 0.0
        %1371 = vmatpush1.msra.mxu0 0.0
        %1372 = vmatprep.subr.mxu0 0.0
        %1373 = vmatpush1.msra.mxu0 0.0
        %1374 = vmatprep.subr.mxu0 0.0
        %1375 = vmatpush1.msra.mxu0 0.0
        %1376 = vmatprep.subr.mxu0 0.0
        %1377 = vmatpush1.msra.mxu0 0.0
        %1378 = vmatprep.subr.mxu0 0.0
        %1379 = vmatpush1.msra.mxu0 0.0
        %1380 = vmatprep.subr.mxu0 0.0
        %1381 = vmatpush1.msra.mxu0 0.0
        %1382 = vmatprep.subr.mxu0 0.0
        %1383 = vmatpush1.msra.mxu0 0.0
        %1384 = vmatprep.subr.mxu0 0.0
        %1385 = vmatpush1.msra.mxu0 0.0
        %1386 = vmatprep.subr.mxu0 0.0
        %1387 = vmatpush1.msra.mxu0 0.0
        %1388 = vmatprep.subr.mxu0 0.0
        %1389 = vmatpush1.msra.mxu0 0.0
        %1390 = vmatprep.subr.mxu0 0.0
        %1391 = vmatpush1.msra.mxu0 0.0
        %1392 = vmatprep.mubr.f32.mxu0 0.0
        %1393 = vmatmul.mubr.f32.gmra.mrb[0].mxu0 %v1326
        %v1394 = vpop.f32.mrb[0].mxu0
        %v1395 = vadd.f32 %v1324, %v1394
        %v1396 = vpop.f32.mrb[0].mxu0
        %1397 = vdwg.mxu0
        %v1398 = vmax.f32 %v1395, 0.0
        %v1399 = vld [vmem:[%s7] sm:$0xff]
        %v1400 = vld [vmem:[%s7 + $0x8] sm:$0xff]
        %v1401 = vld [vmem:[%s8] sm:$0xff]
        %v1402 = vld [vmem:[%s8 + $0x8] sm:$0xff]
        %vm1403 = vcmask 31744
        %v1405 = vsel %vm1403, %v1399, 0
        %v1408 = vsel %vm1403, %v1400, 0
        %vm1410 = vcmask 1043456
        %v1412 = vsel %vm1410, %v1398, 0
        %1414 = vmatprep.subr.mxu0 0.0
        %1415 = vmatpush1.msra.mxu0 %v1412
        %1416 = vmatprep.subr.mxu0 0.0
        %1417 = vmatpush1.msra.mxu0 0.0
        %1418 = vmatprep.subr.mxu0 0.0
        %1419 = vmatpush1.msra.mxu0 0.0
        %1420 = vmatprep.subr.mxu0 0.0
        %1421 = vmatpush1.msra.mxu0 0.0
        %1422 = vmatprep.subr.mxu0 0.0
        %1423 = vmatpush1.msra.mxu0 0.0
        %1424 = vmatprep.subr.mxu0 0.0
        %1425 = vmatpush1.msra.mxu0 0.0
        %1426 = vmatprep.subr.mxu0 0.0
        %1427 = vmatpush1.msra.mxu0 0.0
        %1428 = vmatprep.subr.mxu0 0.0
        %1429 = vmatpush1.msra.mxu0 0.0
        %1430 = vmatprep.subr.mxu0 0.0
        %1431 = vmatpush1.msra.mxu0 0.0
        %1432 = vmatprep.subr.mxu0 0.0
        %1433 = vmatpush1.msra.mxu0 0.0
        %1434 = vmatprep.subr.mxu0 0.0
        %1435 = vmatpush1.msra.mxu0 0.0
        %1436 = vmatprep.subr.mxu0 0.0
        %1437 = vmatpush1.msra.mxu0 0.0
        %1438 = vmatprep.subr.mxu0 0.0
        %1439 = vmatpush1.msra.mxu0 0.0
        %1440 = vmatprep.subr.mxu0 0.0
        %1441 = vmatpush1.msra.mxu0 0.0
        %1442 = vmatprep.subr.mxu0 0.0
        %1443 = vmatpush1.msra.mxu0 0.0
        %1444 = vmatprep.subr.mxu0 0.0
        %1445 = vmatpush1.msra.mxu0 0.0
        %1446 = vmatprep.subr.mxu0 0.0
        %1447 = vmatpush1.msra.mxu0 0.0
        %1448 = vmatprep.subr.mxu0 0.0
        %1449 = vmatpush1.msra.mxu0 0.0
        %1450 = vmatprep.subr.mxu0 0.0
        %1451 = vmatpush1.msra.mxu0 0.0
        %1452 = vmatprep.subr.mxu0 0.0
        %1453 = vmatpush1.msra.mxu0 0.0
        %1454 = vmatprep.subr.mxu0 0.0
        %1455 = vmatpush1.msra.mxu0 0.0
        %1456 = vmatprep.subr.mxu0 0.0
        %1457 = vmatpush1.msra.mxu0 0.0
        %1458 = vmatprep.subr.mxu0 0.0
        %1459 = vmatpush1.msra.mxu0 0.0
        %1460 = vmatprep.subr.mxu0 0.0
        %1461 = vmatpush1.msra.mxu0 0.0
        %1462 = vmatprep.subr.mxu0 0.0
        %1463 = vmatpush1.msra.mxu0 0.0
        %1464 = vmatprep.subr.mxu0 0.0
        %1465 = vmatpush1.msra.mxu0 0.0
        %1466 = vmatprep.subr.mxu0 0.0
        %1467 = vmatpush1.msra.mxu0 0.0
        %1468 = vmatprep.subr.mxu0 0.0
        %1469 = vmatpush1.msra.mxu0 0.0
        %1470 = vmatprep.subr.mxu0 0.0
        %1471 = vmatpush1.msra.mxu0 0.0
        %1472 = vmatprep.subr.mxu0 0.0
        %1473 = vmatpush1.msra.mxu0 0.0
        %1474 = vmatprep.subr.mxu0 0.0
        %1475 = vmatpush1.msra.mxu0 0.0
        %1476 = vmatprep.subr.mxu0 0.0
        %1477 = vmatpush1.msra.mxu0 0.0
        %1478 = vmatprep.mubr.f32.mxu0 0.0
        %1479 = vmatmul.mubr.f32.gmra.mrb[0].mxu0 %v1405
        %v1480 = vpop.f32.mrb[0].mxu0
        %v1481 = vadd.f32 %v1401, %v1480
        %v1482 = vpop.f32.mrb[0].mxu0
        %1483 = vmatprep.mubr.f32.mxu0 0.0
        %1484 = vmatmul.mubr.f32.gmra.mrb[0].mxu0 %v1408
        %v1485 = vpop.f32.mrb[0].mxu0
        %v1486 = vadd.f32 %v1402, %v1485
        %v1487 = vpop.f32.mrb[0].mxu0
        %1488 = vdwg.mxu0
        %v1489 = vsub.f32 0.0, %v1481
        %v1490 = vsub.f32 0.0, %v1486
        %v1491 = vmul.f32 %v1489, 1.442695
        %v1492 = vpow.pop %v1491
        %v1493 = vmul.f32 %v1490, 1.442695
        %v1494 = vpow.pop %v1493
        %v1495 = vadd.f32 %v1492, 1.0
        %v1496 = vadd.f32 %v1494, 1.0
        %v1497 = vrcp.pop %v1495
        %v1498 = vmul.f32 1.0, %v1497
        %v1499 = vrcp.pop %v1496
        %v1500 = vmul.f32 1.0, %v1499
        %1502 = vset.pattern.permute.xlu0 0
        %1503 = vperm.xlu0 %1502, %v1498
        %v1504 = vpop.permute.xlu0 %1503
        %1507 = vset.pattern.permute.xlu0 0
        %1508 = vperm.xlu0 %1507, %v1500
        %v1509 = vpop.permute.xlu0 %1508
        %v1511 = vmul.f32 %v1205, %v1504
        %v1512 = vmul.f32 %v1207, %v1504
        %v1513 = vmul.f32 %v1282, %v1504
        %v1514 = vmul.f32 %v1211, %v1509
        %v1515 = vmul.f32 %v1213, %v1509
        %v1516 = vmul.f32 %v1287, %v1509
        %v1517 = vadd.f32 %v1511, %v655
        %v1518 = vadd.f32 %v1512, %v656
        %v1519 = vadd.f32 %v1513, %v657
        %v1520 = vadd.f32 %v1514, %v658
        %v1521 = vadd.f32 %v1515, %v659
        %v1522 = vadd.f32 %v1516, %v660
        %1523 = vst [vmem:[%s404] sm:$0xff] %v1517
        %1524 = vst [vmem:[%s404 + $0x8] sm:$0xff] %v1518
        %1525 = vst [vmem:[%s404 + $0x10] sm:$0xff] %v1519
        %1526 = vst [vmem:[%s404 + $0x18] sm:$0xff] %v1520
        %1527 = vst [vmem:[%s404 + $0x20] sm:$0xff] %v1521
        %1528 = vst [vmem:[%s404 + $0x28] sm:$0xff] %v1522
        %s1529 = sand.u32 %s272, 1
        %s1530 = scalar_lea.sflag [#allocation4], %s1529
        %s1531 = sand.u32 %s272, 1
        %s1532 = smul.addr %s1531, 48
        %s1533 = scalar_lea.vmem [#allocation5], %s1532
        // Predicated region
        $region69: #{tpu_custom_call.1} parent=63 // pred_check
          %p1534 = pneg %p282
        $region70: #{tpu_custom_call.1} parent=63 // pred_check_branch
          %1536 = sbr.rel (%p1534) target = $region72
        $region71: #{tpu_custom_call.1} parent=63 // pred_region
          %s1538 = ssub.s32 768, 768
          %1539 = vsyncadd %s1530, %s1538
          %s1540 = smul.addr %s28, 6
          %s1541 = smul.addr %s1540, 128
          %s1542 = scalar_lea.hbm %s11, %s1541
          %s1543 = sshll.u32 %s1533, 4
          %s1544 = int_to_ptr.vmem [resolvable:$true] %s1543
          %1549 = dma.vmem_to_hbm [thread:$0]  %s1544, 768, %s1542, %s1530, 384, 384, 24
        $region72: #{tpu_custom_call.1} parent=63 // pred_fallthru
          _
      $region64: #{tpu_custom_call.1} parent=5 // pred_fallthru
        _
      %p1550 = scmp.le.s32.totalorder 2, %s23
      // Predicated region
      $region73: #{tpu_custom_call.1} parent=5 // pred_check
        %p1551 = pneg %p1550
      $region74: #{tpu_custom_call.1} parent=5 // pred_check_branch
        %1553 = sbr.rel (%p1551) target = $region76
      $region75: #{tpu_custom_call.1} parent=5 // pred_region
        %s1554 = ssub.s32 %s23, 2
        // Predicated region
        $region77: #{tpu_custom_call.1} parent=75 // pred_check
          %p1555 = pneg %p288
        $region78: #{tpu_custom_call.1} parent=75 // pred_check_branch
          %1557 = sbr.rel (%p1555) target = $region80
        $region79: #{tpu_custom_call.1} parent=75 // pred_region
          %s1558 = sand.u32 %s273, 1
          %s1559 = scalar_lea.sflag [#allocation4], %s1558
          %s1560 = sand.u32 %s273, 1
          %s1561 = smul.addr %s1560, 48
          %s1562 = scalar_lea.vmem [#allocation5], %s1561
          %1563 = dma.done %s1559, 768
        $region80: #{tpu_custom_call.1} parent=75 // pred_fallthru
          _
      $region76: #{tpu_custom_call.1} parent=5 // pred_fallthru
        _
    $region6: #{tpu_custom_call.1} parent=1 // loop_footer
      %s27 = sadd.s32 1, %s23
    $region7: #{tpu_custom_call.1} parent=1 // loop_footer_branch
      %22 = sbr.rel target = $region3
    $region8: #{tpu_custom_call.1} parent=1 // loop_exit
      _
    %1564 = vsyncpa [#allocation3], 1
    %s1565 = scalar_lea.sflag [#allocation3], 1
    %1566 = vsyncpa %s1565, 1
    %1567 = vsyncpa [#allocation4], 1
    %s1568 = scalar_lea.sflag [#allocation4], 1
    %1569 = vsyncpa %s1568, 1

</llo_original>
